<compile_context>
chip_gen: v7x
topology: tpu7x:2x2x1
jax: 0.10.0
libtpu: 0.0.40
codegen_flags: <defaults>
</compile_context>

<pallas_src>
from functools import partial

import jax
import jax.numpy as jnp
from jax.experimental import pallas as pl
from jax.experimental.pallas import tpu as pltpu


def _ceil_div(a, b):
    return -(-a // b)


def _round_up(a, b):
    return _ceil_div(a, b) * b


def _pick_tile_h(h_out, wp, c_in, c_out, n_phase, halo, ksize):
    """Largest output-row tile whose per-step VMEM footprint fits a budget
    that is safe on every TPU generation (v5e 16 MiB scoped default, v7x
    64 MiB physical VMEM)."""
    try:
        vmem_cap = int(pltpu.get_tpu_info().vmem_capacity_bytes)
    except Exception:                      # conservative fallback (v7x-sized)
        vmem_cap = 64 << 20
    budget = min(12 << 20, vmem_cap // 4)

    def footprint(th):
        rows_in = th + halo
        strip = rows_in * wp + halo
        rows = th * wp
        # VMEM tiled-layout padded sizes (bf16 tile (16,128), f32 tile (8,128)).
        x_t = n_phase * _round_up(strip, 16) * _round_up(c_in, 128) * 2
        w_t = ksize * ksize * _round_up(c_in, 16) * _round_up(c_out, 128) * 2
        c_t = _round_up(rows, 16) * _round_up(c_out, 128) * 2     # bf16 conv tile
        a_t = _round_up(rows, 8) * _round_up(c_out, 128) * 4      # f32 accumulator
        l_t = _round_up(rows, 16) * _round_up(c_in, 128) * 2      # transient lhs
        return 2 * (x_t + w_t + c_t) + a_t + 2 * l_t + (64 << 10)

    th = max(1, min(h_out, 256))
    while th > 1 and footprint(th) > budget:
        th -= 1
    return th


# ---------------------------------------------------------------------------
# Phase 1: conv as k*k shifted MXU matmuls (bf16 in, f32 accumulate)
#          + per-tile per-channel sum / sum-of-squares for BatchNorm.
# ---------------------------------------------------------------------------
def _conv_stats_kernel(x_ref, w_ref, conv_ref, stats_ref, *,
                       ksize, stride, wp, w_out):
    # x_ref:    (stride*stride, strip_len, Cin) bf16  -- phase-decomposed,
    #           halo'd, row-flattened input strip for this (image, row-tile).
    # w_ref:    (ksize*ksize, Cin, Cout) bf16
    # conv_ref: (R, Cout) bf16, R = tile_h * wp; columns w >= w_out of every
    #           flattened row are don't-care positions.
    # stats_ref:(2, Cout) f32 -- [sum, sum-of-squares] over valid positions.
    rows, cout = conv_ref.shape
    acc = jnp.zeros((rows, cout), jnp.float32)
    for ki in range(ksize):
        qi, ri = ki // stride, ki % stride
        for kj in range(ksize):
            qj, rj = kj // stride, kj % stride
            phase = ri * stride + rj
            shift = qi * wp + qj
            lhs = x_ref[phase, shift:shift + rows, :]          # (R, Cin) bf16
            acc = acc + jnp.dot(lhs, w_ref[ki * ksize + kj],
                                preferred_element_type=jnp.float32)
    conv_ref[...] = acc.astype(conv_ref.dtype)

    # BatchNorm batch statistics (f32); mask the wp - w_out don't-care columns
    # (zero-padded extra rows already contribute exactly 0 since bias is dropped).
    pos = jax.lax.broadcasted_iota(jnp.int32, (rows, 1), 0)
    valid = (pos % wp) < w_out
    a = jnp.where(valid, acc, 0.0)
    stats_ref[0:1, :] = jnp.sum(a, axis=0, keepdims=True)
    stats_ref[1:2, :] = jnp.sum(a * a, axis=0, keepdims=True)


# ---------------------------------------------------------------------------
# Phase 2: folded BatchNorm (y = conv*scale + shift) + LeakyReLU, in place.
# ---------------------------------------------------------------------------
def _bn_lrelu_kernel(conv_ref, ss_ref, out_ref, *, negative_slope):
    y = conv_ref[...].astype(jnp.float32) * ss_ref[0:1, :] + ss_ref[1:2, :]
    out_ref[...] = jnp.where(y >= 0.0, y, negative_slope * y).astype(out_ref.dtype)


@partial(jax.jit, static_argnames=("stride", "eps", "negative_slope"))
def convolutional_block(x_nchw, w_oihw, bias, gamma, beta, *,
                        stride, eps=1e-5, negative_slope=0.2):
    """Forward pass equivalent to the PyTorch ConvolutionalBlock (train mode)."""
    N, Cin, H, W = x_nchw.shape
    Cout, _, kh, kw = w_oihw.shape
    assert kh == kw, "square kernels only"
    k = kh
    s = int(stride)
    p = k // 2
    Hout = (H + 2 * p - k) // s + 1
    Wout = (W + 2 * p - k) // s + 1
    halo = (k - 1) // s            # extra phase rows/cols a tile needs
    Wp = Wout + halo
    nph = s * s

    # The conv bias is exactly cancelled by the train-mode BatchNorm mean
    # subtraction (variance unaffected) -> drop it (one fewer operand/DMA).
    del bias

    tile_h = _pick_tile_h(Hout, Wp, Cin, Cout, nph, halo, k)
    T = _ceil_div(Hout, tile_h)
    Hp_need = T * tile_h + halo
    rows_in = tile_h + halo
    R = tile_h * Wp
    # +halo tail so the largest static in-kernel shift (halo*Wp + halo) stays
    # in bounds; those tail elements only feed don't-care output positions.
    strip_len = rows_in * Wp + halo

    # --- glue: NCHW -> NHWC bf16, spatial pad, stride-phase decomposition,
    #     halo'd row tiles.  This is the only input reorganization (~1.1x the
    #     input bytes); no im2col / K-padding ever hits HBM. -------------------
    x = jnp.transpose(x_nchw, (0, 2, 3, 1)).astype(jnp.bfloat16)
    H_cover = _round_up(max(s * Hp_need, H + 2 * p), s)
    W_cover = _round_up(max(s * Wp, W + 2 * p), s)
    x_pad = jnp.pad(x, ((0, 0), (p, H_cover - H - p), (p, W_cover - W - p), (0, 0)))
    xs = x_pad.reshape(N, H_cover // s, s, W_cover // s, s, Cin)
    xs = jnp.transpose(xs, (2, 4, 0, 1, 3, 5))               # (ri, rj, N, h, w, c)
    xs = xs.reshape(nph, N, H_cover // s, W_cover // s, Cin)[:, :, :Hp_need, :Wp, :]
    parts = [xs[:, :, t * tile_h: t * tile_h + rows_in] for t in range(T)]
    tiles = jnp.stack(parts, axis=0)                         # (T, nph, N, rows_in, Wp, Cin)
    tiles = jnp.transpose(tiles, (2, 0, 1, 3, 4, 5))         # (N, T, nph, rows_in, Wp, Cin)
    tiles = tiles.reshape(N, T, nph, rows_in * Wp, Cin)
    tiles = jnp.pad(tiles, ((0, 0), (0, 0), (0, 0),
                            (0, strip_len - rows_in * Wp), (0, 0)))

    # Weights [Cout, Cin, k, k] -> [k*k, Cin, Cout] bf16 (no padding).
    w3 = jnp.transpose(w_oihw, (2, 3, 1, 0)).reshape(k * k, Cin, Cout)
    w3 = w3.astype(jnp.bfloat16)

    # ---- phase 1: tiled shifted-matmul conv + per-tile per-channel sums -----
    conv_buf, stats = pl.pallas_call(
        partial(_conv_stats_kernel, ksize=k, stride=s, wp=Wp, w_out=Wout),
        out_shape=(jax.ShapeDtypeStruct((N, T, R, Cout), jnp.bfloat16),
                   jax.ShapeDtypeStruct((N, T, 2, Cout), jnp.float32)),
        grid=(N, T),
        in_specs=[
            pl.BlockSpec((None, None, nph, strip_len, Cin),
                         lambda n, t: (n, t, 0, 0, 0)),
            pl.BlockSpec((k * k, Cin, Cout), lambda n, t: (0, 0, 0)),
        ],
        out_specs=(
            pl.BlockSpec((None, None, R, Cout), lambda n, t: (n, t, 0, 0)),
            pl.BlockSpec((None, None, 2, Cout), lambda n, t: (n, t, 0, 0)),
        ),
        compiler_params=pltpu.CompilerParams(
            dimension_semantics=("parallel", "parallel")),
    )(tiles, w3)

    # ---- tiny cross-tile reduction + fold BN into per-channel scale/shift ---
    # NOTE: var = E[x^2] - mean^2 in f32; fine for activation-scale data.
    cnt = jnp.float32(N * Hout * Wout)
    s1 = jnp.sum(stats[:, :, 0, :], axis=(0, 1))
    s2 = jnp.sum(stats[:, :, 1, :], axis=(0, 1))
    mean = s1 / cnt
    var = jnp.maximum(s2 / cnt - mean * mean, 0.0)
    scale = gamma.astype(jnp.float32) * jax.lax.rsqrt(var + eps)
    shift = beta.astype(jnp.float32) - mean * scale
    ss = jnp.stack([scale, shift], axis=0)                   # (2, Cout) f32

    # ---- phase 2: normalize + LeakyReLU, in place over the bf16 conv buffer -
    out_buf = pl.pallas_call(
        partial(_bn_lrelu_kernel, negative_slope=negative_slope),
        out_shape=jax.ShapeDtypeStruct((N, T, R, Cout), jnp.bfloat16),
        grid=(N, T),
        in_specs=[
            pl.BlockSpec((None, None, R, Cout), lambda n, t: (n, t, 0, 0)),
            pl.BlockSpec((2, Cout), lambda n, t: (0, 0)),
        ],
        out_specs=pl.BlockSpec((None, None, R, Cout), lambda n, t: (n, t, 0, 0)),
        input_output_aliases={0: 0},
        compiler_params=pltpu.CompilerParams(
            dimension_semantics=("parallel", "parallel")),
    )(conv_buf, ss)

    # --- glue: drop don't-care columns / padded rows, back to NCHW -----------
    out = out_buf.reshape(N, T * tile_h, Wp, Cout)[:, :Hout, :Wout, :]
    return jnp.transpose(out, (0, 3, 1, 2))                  # bf16, NCHW


def _reference(x_nchw, w_oihw, bias, gamma, beta, *, stride, eps, slope):
    """Pure-JAX f32 reference (lax conv + batch-stat BN + leaky relu)."""
    p = w_oihw.shape[2] // 2
    conv = jax.lax.conv_general_dilated(
        x_nchw.astype(jnp.float32), w_oihw.astype(jnp.float32),
        window_strides=(stride, stride), padding=((p, p), (p, p)),
        dimension_numbers=("NCHW", "OIHW", "NCHW"))
    conv = conv + bias.reshape(1, -1, 1, 1)
    mean = conv.mean(axis=(0, 2, 3), keepdims=True)
    var = ((conv - mean) ** 2).mean(axis=(0, 2, 3), keepdims=True)
    y = (conv - mean) / jnp.sqrt(var + eps)
    y = y * gamma.reshape(1, -1, 1, 1) + beta.reshape(1, -1, 1, 1)
    return jnp.where(y >= 0, y, slope * y)


if __name__ == "__main__":
    # Small shapes consistent with the module: batch=2, Cin=4, Cout=8, 16x16.
    N, Cin, Cout, H, W = 2, 4, 8, 16, 16
    stride, ksize, slope, eps = 2, 3, 0.2, 1e-5

    key = jax.random.PRNGKey(0)
    kx, kw, kb = jax.random.split(key, 3)
    x = jax.random.normal(kx, (N, Cin, H, W), dtype=jnp.float32)
    w = jax.random.normal(kw, (Cout, Cin, ksize, ksize), dtype=jnp.float32) * 0.1
    b = jax.random.normal(kb, (Cout,), dtype=jnp.float32) * 0.1
    gamma = jnp.ones((Cout,), dtype=jnp.float32)   # BatchNorm2d default init
    beta = jnp.zeros((Cout,), dtype=jnp.float32)   # BatchNorm2d default init

    out = convolutional_block(x, w, b, gamma, beta,
                              stride=stride, eps=eps, negative_slope=slope)
    out = jax.block_until_ready(out).astype(jnp.float32)

    ref = _reference(x, w, b, gamma, beta, stride=stride, eps=eps, slope=slope)
    assert out.shape == ref.shape, (out.shape, ref.shape)
    # Tolerance covers bf16 MXU inputs + bf16 conv intermediate + bf16 output
    # (the accumulation and all BatchNorm math are f32); typical error ~1e-3.
    err = jnp.abs(out - ref)
    assert float(err.max()) < 6e-2, float(err.max())
    assert float(err.mean()) < 8e-3, float(err.mean())

    print("KERNEL_OK")
</pallas_src>

<mosaic_0001>
module attributes {stable_mosaic.version = 11 : i64} {
  func.func @_conv_stats_kernel(%arg0: i32, %arg1: i32, %arg2: memref<1x1x4x82x4xbf16, #tpu.memory_space<vmem>>, %arg3: memref<9x4x8xbf16, #tpu.memory_space<vmem>>, %arg4: memref<1x1x72x8xbf16, #tpu.memory_space<vmem>>, %arg5: memref<1x1x2x8xf32, #tpu.memory_space<vmem>>) attributes {dimension_semantics = [#tpu.dimension_semantics<parallel>, #tpu.dimension_semantics<parallel>], iteration_bounds = array<i64: 2, 1>, scalar_prefetch = 0 : i64, scratch_operands = 0 : i64, tpu.core_type = #tpu.core_type<tc>, window_params = [{transform_indices = @transform_0, window_bounds = array<i64: 1, 1, 4, 82, 4>}, {pipeline_mode = #tpu.pipeline_mode<synchronous>, transform_indices = @transform_1, window_bounds = array<i64: 9, 4, 8>}, {transform_indices = @transform_2, window_bounds = array<i64: 1, 1, 72, 8>}, {transform_indices = @transform_3, window_bounds = array<i64: 1, 1, 2, 8>}]} {
    %cst = arith.constant 0.000000e+00 : f32
    %0 = vector.broadcast %cst : f32 to vector<72x8xf32>
    %c0 = arith.constant 0 : index
    %c0_0 = arith.constant 0 : index
    %c0_1 = arith.constant 0 : index
    %c0_2 = arith.constant 0 : index
    %c0_3 = arith.constant 0 : index
    %1 = vector.load %arg2[%c0, %c0_0, %c0_1, %c0_2, %c0_3] : memref<1x1x4x82x4xbf16, #tpu.memory_space<vmem>>, vector<1x1x1x72x4xbf16>
    %2 = vector.shape_cast %1 : vector<1x1x1x72x4xbf16> to vector<72x4xbf16>
    %c0_4 = arith.constant 0 : index
    %c0_5 = arith.constant 0 : index
    %c0_6 = arith.constant 0 : index
    %3 = vector.load %arg3[%c0_4, %c0_5, %c0_6] : memref<9x4x8xbf16, #tpu.memory_space<vmem>>, vector<1x4x8xbf16>
    %4 = vector.shape_cast %3 : vector<1x4x8xbf16> to vector<4x8xbf16>
    %cst_7 = arith.constant dense<0.000000e+00> : vector<72x8xf32>
    %5 = tpu.matmul %2, %4, %cst_7 {dimension_numbers = #tpu.dot_dimension_numbers<[1], [0], [0], [1], [0, 0, 1, 1], [], []>} : vector<72x4xbf16>, vector<4x8xbf16>, vector<72x8xf32> -> vector<72x8xf32>
    %6 = arith.addf %0, %5 : vector<72x8xf32>
    %c0_8 = arith.constant 0 : index
    %c0_9 = arith.constant 0 : index
    %c1 = arith.constant 1 : index
    %c0_10 = arith.constant 0 : index
    %c0_11 = arith.constant 0 : index
    %7 = vector.load %arg2[%c0_8, %c0_9, %c1, %c0_10, %c0_11] : memref<1x1x4x82x4xbf16, #tpu.memory_space<vmem>>, vector<1x1x1x72x4xbf16>
    %8 = vector.shape_cast %7 : vector<1x1x1x72x4xbf16> to vector<72x4xbf16>
    %c1_12 = arith.constant 1 : index
    %c0_13 = arith.constant 0 : index
    %c0_14 = arith.constant 0 : index
    %9 = vector.load %arg3[%c1_12, %c0_13, %c0_14] : memref<9x4x8xbf16, #tpu.memory_space<vmem>>, vector<1x4x8xbf16>
    %10 = vector.shape_cast %9 : vector<1x4x8xbf16> to vector<4x8xbf16>
    %cst_15 = arith.constant dense<0.000000e+00> : vector<72x8xf32>
    %11 = tpu.matmul %8, %10, %cst_15 {dimension_numbers = #tpu.dot_dimension_numbers<[1], [0], [0], [1], [0, 0, 1, 1], [], []>} : vector<72x4xbf16>, vector<4x8xbf16>, vector<72x8xf32> -> vector<72x8xf32>
    %12 = arith.addf %6, %11 : vector<72x8xf32>
    %c0_16 = arith.constant 0 : index
    %c0_17 = arith.constant 0 : index
    %c0_18 = arith.constant 0 : index
    %c1_19 = arith.constant 1 : index
    %c0_20 = arith.constant 0 : index
    %13 = vector.load %arg2[%c0_16, %c0_17, %c0_18, %c1_19, %c0_20] : memref<1x1x4x82x4xbf16, #tpu.memory_space<vmem>>, vector<1x1x1x72x4xbf16>
    %14 = vector.shape_cast %13 : vector<1x1x1x72x4xbf16> to vector<72x4xbf16>
    %c2 = arith.constant 2 : index
    %c0_21 = arith.constant 0 : index
    %c0_22 = arith.constant 0 : index
    %15 = vector.load %arg3[%c2, %c0_21, %c0_22] : memref<9x4x8xbf16, #tpu.memory_space<vmem>>, vector<1x4x8xbf16>
    %16 = vector.shape_cast %15 : vector<1x4x8xbf16> to vector<4x8xbf16>
    %cst_23 = arith.constant dense<0.000000e+00> : vector<72x8xf32>
    %17 = tpu.matmul %14, %16, %cst_23 {dimension_numbers = #tpu.dot_dimension_numbers<[1], [0], [0], [1], [0, 0, 1, 1], [], []>} : vector<72x4xbf16>, vector<4x8xbf16>, vector<72x8xf32> -> vector<72x8xf32>
    %18 = arith.addf %12, %17 : vector<72x8xf32>
    %c0_24 = arith.constant 0 : index
    %c0_25 = arith.constant 0 : index
    %c2_26 = arith.constant 2 : index
    %c0_27 = arith.constant 0 : index
    %c0_28 = arith.constant 0 : index
    %19 = vector.load %arg2[%c0_24, %c0_25, %c2_26, %c0_27, %c0_28] : memref<1x1x4x82x4xbf16, #tpu.memory_space<vmem>>, vector<1x1x1x72x4xbf16>
    %20 = vector.shape_cast %19 : vector<1x1x1x72x4xbf16> to vector<72x4xbf16>
    %c3 = arith.constant 3 : index
    %c0_29 = arith.constant 0 : index
    %c0_30 = arith.constant 0 : index
    %21 = vector.load %arg3[%c3, %c0_29, %c0_30] : memref<9x4x8xbf16, #tpu.memory_space<vmem>>, vector<1x4x8xbf16>
    %22 = vector.shape_cast %21 : vector<1x4x8xbf16> to vector<4x8xbf16>
    %cst_31 = arith.constant dense<0.000000e+00> : vector<72x8xf32>
    %23 = tpu.matmul %20, %22, %cst_31 {dimension_numbers = #tpu.dot_dimension_numbers<[1], [0], [0], [1], [0, 0, 1, 1], [], []>} : vector<72x4xbf16>, vector<4x8xbf16>, vector<72x8xf32> -> vector<72x8xf32>
    %24 = arith.addf %18, %23 : vector<72x8xf32>
    %c0_32 = arith.constant 0 : index
    %c0_33 = arith.constant 0 : index
    %c3_34 = arith.constant 3 : index
    %c0_35 = arith.constant 0 : index
    %c0_36 = arith.constant 0 : index
    %25 = vector.load %arg2[%c0_32, %c0_33, %c3_34, %c0_35, %c0_36] : memref<1x1x4x82x4xbf16, #tpu.memory_space<vmem>>, vector<1x1x1x72x4xbf16>
    %26 = vector.shape_cast %25 : vector<1x1x1x72x4xbf16> to vector<72x4xbf16>
    %c4 = arith.constant 4 : index
    %c0_37 = arith.constant 0 : index
    %c0_38 = arith.constant 0 : index
    %27 = vector.load %arg3[%c4, %c0_37, %c0_38] : memref<9x4x8xbf16, #tpu.memory_space<vmem>>, vector<1x4x8xbf16>
    %28 = vector.shape_cast %27 : vector<1x4x8xbf16> to vector<4x8xbf16>
    %cst_39 = arith.constant dense<0.000000e+00> : vector<72x8xf32>
    %29 = tpu.matmul %26, %28, %cst_39 {dimension_numbers = #tpu.dot_dimension_numbers<[1], [0], [0], [1], [0, 0, 1, 1], [], []>} : vector<72x4xbf16>, vector<4x8xbf16>, vector<72x8xf32> -> vector<72x8xf32>
    %30 = arith.addf %24, %29 : vector<72x8xf32>
    %c0_40 = arith.constant 0 : index
    %c0_41 = arith.constant 0 : index
    %c2_42 = arith.constant 2 : index
    %c1_43 = arith.constant 1 : index
    %c0_44 = arith.constant 0 : index
    %31 = vector.load %arg2[%c0_40, %c0_41, %c2_42, %c1_43, %c0_44] : memref<1x1x4x82x4xbf16, #tpu.memory_space<vmem>>, vector<1x1x1x72x4xbf16>
    %32 = vector.shape_cast %31 : vector<1x1x1x72x4xbf16> to vector<72x4xbf16>
    %c5 = arith.constant 5 : index
    %c0_45 = arith.constant 0 : index
    %c0_46 = arith.constant 0 : index
    %33 = vector.load %arg3[%c5, %c0_45, %c0_46] : memref<9x4x8xbf16, #tpu.memory_space<vmem>>, vector<1x4x8xbf16>
    %34 = vector.shape_cast %33 : vector<1x4x8xbf16> to vector<4x8xbf16>
    %cst_47 = arith.constant dense<0.000000e+00> : vector<72x8xf32>
    %35 = tpu.matmul %32, %34, %cst_47 {dimension_numbers = #tpu.dot_dimension_numbers<[1], [0], [0], [1], [0, 0, 1, 1], [], []>} : vector<72x4xbf16>, vector<4x8xbf16>, vector<72x8xf32> -> vector<72x8xf32>
    %36 = arith.addf %30, %35 : vector<72x8xf32>
    %c0_48 = arith.constant 0 : index
    %c0_49 = arith.constant 0 : index
    %c0_50 = arith.constant 0 : index
    %c9 = arith.constant 9 : index
    %c0_51 = arith.constant 0 : index
    %37 = vector.load %arg2[%c0_48, %c0_49, %c0_50, %c9, %c0_51] : memref<1x1x4x82x4xbf16, #tpu.memory_space<vmem>>, vector<1x1x1x72x4xbf16>
    %38 = vector.shape_cast %37 : vector<1x1x1x72x4xbf16> to vector<72x4xbf16>
    %c6 = arith.constant 6 : index
    %c0_52 = arith.constant 0 : index
    %c0_53 = arith.constant 0 : index
    %39 = vector.load %arg3[%c6, %c0_52, %c0_53] : memref<9x4x8xbf16, #tpu.memory_space<vmem>>, vector<1x4x8xbf16>
    %40 = vector.shape_cast %39 : vector<1x4x8xbf16> to vector<4x8xbf16>
    %cst_54 = arith.constant dense<0.000000e+00> : vector<72x8xf32>
    %41 = tpu.matmul %38, %40, %cst_54 {dimension_numbers = #tpu.dot_dimension_numbers<[1], [0], [0], [1], [0, 0, 1, 1], [], []>} : vector<72x4xbf16>, vector<4x8xbf16>, vector<72x8xf32> -> vector<72x8xf32>
    %42 = arith.addf %36, %41 : vector<72x8xf32>
    %c0_55 = arith.constant 0 : index
    %c0_56 = arith.constant 0 : index
    %c1_57 = arith.constant 1 : index
    %c9_58 = arith.constant 9 : index
    %c0_59 = arith.constant 0 : index
    %43 = vector.load %arg2[%c0_55, %c0_56, %c1_57, %c9_58, %c0_59] : memref<1x1x4x82x4xbf16, #tpu.memory_space<vmem>>, vector<1x1x1x72x4xbf16>
    %44 = vector.shape_cast %43 : vector<1x1x1x72x4xbf16> to vector<72x4xbf16>
    %c7 = arith.constant 7 : index
    %c0_60 = arith.constant 0 : index
    %c0_61 = arith.constant 0 : index
    %45 = vector.load %arg3[%c7, %c0_60, %c0_61] : memref<9x4x8xbf16, #tpu.memory_space<vmem>>, vector<1x4x8xbf16>
    %46 = vector.shape_cast %45 : vector<1x4x8xbf16> to vector<4x8xbf16>
    %cst_62 = arith.constant dense<0.000000e+00> : vector<72x8xf32>
    %47 = tpu.matmul %44, %46, %cst_62 {dimension_numbers = #tpu.dot_dimension_numbers<[1], [0], [0], [1], [0, 0, 1, 1], [], []>} : vector<72x4xbf16>, vector<4x8xbf16>, vector<72x8xf32> -> vector<72x8xf32>
    %48 = arith.addf %42, %47 : vector<72x8xf32>
    %c0_63 = arith.constant 0 : index
    %c0_64 = arith.constant 0 : index
    %c0_65 = arith.constant 0 : index
    %c10 = arith.constant 10 : index
    %c0_66 = arith.constant 0 : index
    %49 = vector.load %arg2[%c0_63, %c0_64, %c0_65, %c10, %c0_66] : memref<1x1x4x82x4xbf16, #tpu.memory_space<vmem>>, vector<1x1x1x72x4xbf16>
    %50 = vector.shape_cast %49 : vector<1x1x1x72x4xbf16> to vector<72x4xbf16>
    %c8 = arith.constant 8 : index
    %c0_67 = arith.constant 0 : index
    %c0_68 = arith.constant 0 : index
    %51 = vector.load %arg3[%c8, %c0_67, %c0_68] : memref<9x4x8xbf16, #tpu.memory_space<vmem>>, vector<1x4x8xbf16>
    %52 = vector.shape_cast %51 : vector<1x4x8xbf16> to vector<4x8xbf16>
    %cst_69 = arith.constant dense<0.000000e+00> : vector<72x8xf32>
    %53 = tpu.matmul %50, %52, %cst_69 {dimension_numbers = #tpu.dot_dimension_numbers<[1], [0], [0], [1], [0, 0, 1, 1], [], []>} : vector<72x4xbf16>, vector<4x8xbf16>, vector<72x8xf32> -> vector<72x8xf32>
    %54 = arith.addf %48, %53 : vector<72x8xf32>
    %55 = arith.truncf %54 : vector<72x8xf32> to vector<72x8xbf16>
    %c0_70 = arith.constant 0 : index
    %c0_71 = arith.constant 0 : index
    %c0_72 = arith.constant 0 : index
    %c0_73 = arith.constant 0 : index
    %56 = vector.load %arg4[%c0_70, %c0_71, %c0_72, %c0_73] : memref<1x1x72x8xbf16, #tpu.memory_space<vmem>>, vector<1x1x72x8xbf16>
    %57 = vector.shape_cast %56 : vector<1x1x72x8xbf16> to vector<72x8xbf16>
    %58 = vector.shape_cast %55 : vector<72x8xbf16> to vector<1x1x72x8xbf16>
    tpu.vector_store %arg4[%c0_70, %c0_71, %c0_72, %c0_73], %58 {strides = array<i32>} : memref<1x1x72x8xbf16, #tpu.memory_space<vmem>>, vector<1x1x72x8xbf16>,
    %59 = tpu.iota {dimensions = array<i32: 0>} : vector<72x1xi32>
    %c9_i32 = arith.constant 9 : i32
    %c0_i32 = arith.constant 0 : i32
    %60 = arith.cmpi eq, %c9_i32, %c0_i32 : i32
    %c1_i32 = arith.constant 1 : i32
    %61 = arith.select %60, %c1_i32, %c9_i32 : i32
    %62 = vector.broadcast %61 : i32 to vector<72x1xi32>
    %63 = arith.remsi %59, %62 : vector<72x1xi32>
    %c0_i32_74 = arith.constant 0 : i32
    %64 = vector.broadcast %c0_i32_74 : i32 to vector<72x1xi32>
    %65 = arith.cmpi ne, %63, %64 : vector<72x1xi32>
    %c0_i32_75 = arith.constant 0 : i32
    %66 = vector.broadcast %c0_i32_75 : i32 to vector<72x1xi32>
    %67 = arith.cmpi slt, %63, %66 : vector<72x1xi32>
    %c0_i32_76 = arith.constant 0 : i32
    %68 = arith.cmpi slt, %61, %c0_i32_76 : i32
    %69 = vector.broadcast %68 : i1 to vector<72x1xi1>
    %70 = vector.broadcast %69 : vector<72x1xi1> to vector<72x1xi1>
    %71 = arith.xori %67, %70 : vector<72x1xi1>
    %72 = arith.andi %71, %65 : vector<72x1xi1>
    %73 = vector.broadcast %61 : i32 to vector<72x1xi32>
    %74 = arith.addi %63, %73 : vector<72x1xi32>
    %75 = arith.select %72, %74, %63 : vector<72x1xi1>, vector<72x1xi32>
    %c8_i32 = arith.constant 8 : i32
    %76 = vector.broadcast %c8_i32 : i32 to vector<72x1xi32>
    %77 = arith.cmpi slt, %75, %76 : vector<72x1xi32>
    %cst_77 = arith.constant 0.000000e+00 : f32
    %78 = vector.shape_cast %77 : vector<72x1xi1> to vector<72x1xi1>
    %79 = vector.broadcast %78 : vector<72x1xi1> to vector<72x8xi1>
    %80 = vector.broadcast %cst_77 : f32 to vector<72x8xf32>
    %81 = arith.select %79, %54, %80 : vector<72x8xi1>, vector<72x8xf32>
    %cst_78 = arith.constant dense<0.000000e+00> : vector<8xf32>
    %82 = vector.multi_reduction <add>, %81, %cst_78 [0] : vector<72x8xf32> to vector<8xf32>
    %83 = vector.shape_cast %82 : vector<8xf32> to vector<1x8xf32>
    %c0_79 = arith.constant 0 : index
    %c0_80 = arith.constant 0 : index
    %c0_81 = arith.constant 0 : index
    %c0_82 = arith.constant 0 : index
    %84 = vector.load %arg5[%c0_79, %c0_80, %c0_81, %c0_82] : memref<1x1x2x8xf32, #tpu.memory_space<vmem>>, vector<1x1x1x8xf32>
    %85 = vector.shape_cast %84 : vector<1x1x1x8xf32> to vector<1x8xf32>
    %86 = vector.shape_cast %83 : vector<1x8xf32> to vector<1x1x1x8xf32>
    tpu.vector_store %arg5[%c0_79, %c0_80, %c0_81, %c0_82], %86 {strides = array<i32>} : memref<1x1x2x8xf32, #tpu.memory_space<vmem>>, vector<1x1x1x8xf32>,
    %87 = arith.mulf %81, %81 : vector<72x8xf32>
    %cst_83 = arith.constant dense<0.000000e+00> : vector<8xf32>
    %88 = vector.multi_reduction <add>, %87, %cst_83 [0] : vector<72x8xf32> to vector<8xf32>
    %89 = vector.shape_cast %88 : vector<8xf32> to vector<1x8xf32>
    %c0_84 = arith.constant 0 : index
    %c0_85 = arith.constant 0 : index
    %c1_86 = arith.constant 1 : index
    %c0_87 = arith.constant 0 : index
    %90 = vector.load %arg5[%c0_84, %c0_85, %c1_86, %c0_87] : memref<1x1x2x8xf32, #tpu.memory_space<vmem>>, vector<1x1x1x8xf32>
    %91 = vector.shape_cast %90 : vector<1x1x1x8xf32> to vector<1x8xf32>
    %92 = vector.shape_cast %89 : vector<1x8xf32> to vector<1x1x1x8xf32>
    tpu.vector_store %arg5[%c0_84, %c0_85, %c1_86, %c0_87], %92 {strides = array<i32>} : memref<1x1x2x8xf32, #tpu.memory_space<vmem>>, vector<1x1x1x8xf32>,
    return
  }
  func.func @transform_0(%arg0: i32, %arg1: i32) -> (i32, i32, i32, i32, i32) {
    %c0_i32 = arith.constant 0 : i32
    %c0_i32_0 = arith.constant 0 : i32
    %c0_i32_1 = arith.constant 0 : i32
    %c0_i32_2 = arith.constant 0 : i32
    return %arg0, %arg1, %c0_i32, %c0_i32_0, %c0_i32_1 : i32, i32, i32, i32, i32
  }
  func.func @transform_1(%arg0: i32, %arg1: i32) -> (i32, i32, i32) {
    %c0_i32 = arith.constant 0 : i32
    %c0_i32_0 = arith.constant 0 : i32
    %c0_i32_1 = arith.constant 0 : i32
    %c0_i32_2 = arith.constant 0 : i32
    return %c0_i32, %c0_i32_0, %c0_i32_1 : i32, i32, i32
  }
  func.func @transform_2(%arg0: i32, %arg1: i32) -> (i32, i32, i32, i32) {
    %c0_i32 = arith.constant 0 : i32
    %c0_i32_0 = arith.constant 0 : i32
    %c0_i32_1 = arith.constant 0 : i32
    return %arg0, %arg1, %c0_i32, %c0_i32_0 : i32, i32, i32, i32
  }
  func.func @transform_3(%arg0: i32, %arg1: i32) -> (i32, i32, i32, i32) {
    %c0_i32 = arith.constant 0 : i32
    %c0_i32_0 = arith.constant 0 : i32
    %c0_i32_1 = arith.constant 0 : i32
    return %arg0, %arg1, %c0_i32, %c0_i32_0 : i32, i32, i32, i32
  }
}

module attributes {stable_mosaic.version = 11 : i64} {
  func.func @_bn_lrelu_kernel(%arg0: i32, %arg1: i32, %arg2: memref<1x1x72x8xbf16, #tpu.memory_space<vmem>>, %arg3: memref<2x8xf32, #tpu.memory_space<vmem>>, %arg4: memref<1x1x72x8xbf16, #tpu.memory_space<vmem>>) attributes {dimension_semantics = [#tpu.dimension_semantics<parallel>, #tpu.dimension_semantics<parallel>], iteration_bounds = array<i64: 2, 1>, scalar_prefetch = 0 : i64, scratch_operands = 0 : i64, tpu.core_type = #tpu.core_type<tc>, window_params = [{transform_indices = @transform_0, window_bounds = array<i64: 1, 1, 72, 8>}, {pipeline_mode = #tpu.pipeline_mode<synchronous>, transform_indices = @transform_1, window_bounds = array<i64: 2, 8>}, {transform_indices = @transform_2, window_bounds = array<i64: 1, 1, 72, 8>}]} {
    %c0 = arith.constant 0 : index
    %c0_0 = arith.constant 0 : index
    %c0_1 = arith.constant 0 : index
    %c0_2 = arith.constant 0 : index
    %0 = vector.load %arg2[%c0, %c0_0, %c0_1, %c0_2] : memref<1x1x72x8xbf16, #tpu.memory_space<vmem>>, vector<1x1x72x8xbf16>
    %1 = vector.shape_cast %0 : vector<1x1x72x8xbf16> to vector<72x8xbf16>
    %2 = arith.extf %1 : vector<72x8xbf16> to vector<72x8xf32>
    %c0_3 = arith.constant 0 : index
    %c0_4 = arith.constant 0 : index
    %3 = vector.load %arg3[%c0_3, %c0_4] : memref<2x8xf32, #tpu.memory_space<vmem>>, vector<1x8xf32>
    %4 = vector.broadcast %3 : vector<1x8xf32> to vector<72x8xf32>
    %5 = arith.mulf %2, %4 : vector<72x8xf32>
    %c1 = arith.constant 1 : index
    %c0_5 = arith.constant 0 : index
    %6 = vector.load %arg3[%c1, %c0_5] : memref<2x8xf32, #tpu.memory_space<vmem>>, vector<1x8xf32>
    %7 = vector.broadcast %6 : vector<1x8xf32> to vector<72x8xf32>
    %8 = arith.addf %5, %7 : vector<72x8xf32>
    %cst = arith.constant 0.000000e+00 : f32
    %9 = vector.broadcast %cst : f32 to vector<72x8xf32>
    %10 = arith.cmpf oge, %8, %9 : vector<72x8xf32>
    %cst_6 = arith.constant 2.000000e-01 : f32
    %11 = vector.broadcast %cst_6 : f32 to vector<72x8xf32>
    %12 = arith.mulf %11, %8 : vector<72x8xf32>
    %13 = arith.select %10, %8, %12 : vector<72x8xi1>, vector<72x8xf32>
    %14 = arith.truncf %13 : vector<72x8xf32> to vector<72x8xbf16>
    %c0_7 = arith.constant 0 : index
    %c0_8 = arith.constant 0 : index
    %c0_9 = arith.constant 0 : index
    %c0_10 = arith.constant 0 : index
    %15 = vector.load %arg4[%c0_7, %c0_8, %c0_9, %c0_10] : memref<1x1x72x8xbf16, #tpu.memory_space<vmem>>, vector<1x1x72x8xbf16>
    %16 = vector.shape_cast %15 : vector<1x1x72x8xbf16> to vector<72x8xbf16>
    %17 = vector.shape_cast %14 : vector<72x8xbf16> to vector<1x1x72x8xbf16>
    tpu.vector_store %arg4[%c0_7, %c0_8, %c0_9, %c0_10], %17 {strides = array<i32>} : memref<1x1x72x8xbf16, #tpu.memory_space<vmem>>, vector<1x1x72x8xbf16>,
    return
  }
  func.func @transform_0(%arg0: i32, %arg1: i32) -> (i32, i32, i32, i32) {
    %c0_i32 = arith.constant 0 : i32
    %c0_i32_0 = arith.constant 0 : i32
    %c0_i32_1 = arith.constant 0 : i32
    return %arg0, %arg1, %c0_i32, %c0_i32_0 : i32, i32, i32, i32
  }
  func.func @transform_1(%arg0: i32, %arg1: i32) -> (i32, i32) {
    %c0_i32 = arith.constant 0 : i32
    %c0_i32_0 = arith.constant 0 : i32
    %c0_i32_1 = arith.constant 0 : i32
    return %c0_i32, %c0_i32_0 : i32, i32
  }
  func.func @transform_2(%arg0: i32, %arg1: i32) -> (i32, i32, i32, i32) {
    %c0_i32 = arith.constant 0 : i32
    %c0_i32_0 = arith.constant 0 : i32
    %c0_i32_1 = arith.constant 0 : i32
    return %arg0, %arg1, %c0_i32, %c0_i32_0 : i32, i32, i32, i32
  }
}

</mosaic_0001>

<llo_original>
// kernel: convolutional_block.3
$region0: #{convolutional_block.3}
  #allocation0 [shape = 'u32[]', space=smem, size = 0x4, offset = 0x4, fixed_abs, tag = 'smem constant byte address 0x4 - core index']
  #allocation1 [shape = 'u32[144,128]{1,0:T(1,128)}', space=vmem, size = 0x12000, scoped, tag = 'internal scratch']
  %s0 = inlined_call_operand.vmem [shape: bf16[2,1,72,8], index: 0, kind: input, shape index: {}, may-alias: {0,2}]
  %s1 = inlined_call_operand.vmem [shape: f32[2,8], index: 1, kind: input, shape index: {}]
  %s2 = inlined_call_operand.vmem [shape: bf16[2,1,72,8], index: 2, kind: output, shape index: {}, may-alias: {0,2}]
  %s3 = sld [smem:[#allocation0]]
  $region41: #{convolutional_block.3} parent=0
    _
  %s5 = ssub.s32 1, %s3
  %s6 = scalar_select 0, %s5, %s3
  loop: start=0, step=1, limit=4
  $region2: #{convolutional_block.3} parent=0 // loop_pre_header
    _
  $region3: #{convolutional_block.3} parent=0 // loop_header
    %s8 = sphi 0, %s12
    %p9 = scmp.ge.s32.totalorder %s8, 4
    %s15 = sphi 0, %s27
    %s16 = sphi 0, %s23
    %s17 = sphi 0, %s15
    %s18 = sphi 0, %s16
    %s19 = sphi 0, %s17
    %s20 = sphi 0, %s18
    %s32 = sphi 0, %s34
    %s35 = sphi 0, %s32
    %s36 = sphi 0, %s35
    %s52 = sphi 0, %s36
    %s56 = sphi 0, %s56
    %s58 = sphi 0, %s56
    %s59 = sphi 0, %s58
    %s73 = sphi 0, %s59
    %s81 = sphi 0, %s83
    %s84 = sphi 0, %s81
    %s85 = sphi 0, %s84
    %s101 = sphi 0, %s85
  $region4: #{convolutional_block.3} parent=0 // loop_header_branch
    %11 = sbr.rel (%p9) target = $region8
  $region5: #{convolutional_block.3} parent=0 // loop_body
    %s13 = ssub.s32 %s8, 1
    %s14 = ssub.s32 %s8, 2
    %s21 = sadd.s32 1, %s16
    %p22 = scmp.ge.s32.totalorder %s21, 1
    %s23 = scalar_select %p22, 0, %s21
    %s24 = sadd.s32 1, %s15
    %s25 = scalar_select %p22, %s24, %s15
    %p26 = scmp.ge.s32.totalorder %s25, 2
    %s27 = scalar_select %p26, 0, %s25
    %s28 = ssub.s32 %s15, %s27
    %s29 = ssub.s32 %s16, %s23
    %s30 = sor.u32 %s28, %s29
    %p31 = scmp.eq.s32.totalorder %s30, 0
    %s33 = sadd.s32 %s32, 1
    %s34 = scalar_select %p31, %s32, %s33
    %p37 = pneg %p31
    %p38 = scmp.eq.s32.totalorder %s8, 1
    %p39 = por %p37, %p38
    %p40 = scmp.ne.s32.totalorder %s32, %s35
    %p41 = scmp.eq.s32.totalorder %s8, 0
    %p42 = por %p40, %p41
    %p43 = scmp.ne.s32.totalorder %s32, %s35
    %p44 = scmp.eq.s32.totalorder %s13, 1
    %p45 = por %p43, %p44
    %p46 = scmp.ne.s32.totalorder %s35, %s36
    %p47 = scmp.eq.s32.totalorder %s13, 0
    %p48 = por %p46, %p47
    %p49 = scmp.ne.s32.totalorder %s35, %s36
    %p50 = scmp.eq.s32.totalorder %s14, 1
    %p51 = por %p49, %p50
    %p53 = scmp.ne.s32.totalorder %s36, %s52
    %p54 = scmp.eq.s32.totalorder %s14, 0
    %p55 = por %p53, %p54
    %s57 = sadd.s32 %s56, 1
    %p60 = scmp.eq.s32.totalorder %s8, 1
    %p61 = scmp.ne.s32.totalorder %s56, %s58
    %p62 = scmp.eq.s32.totalorder %s8, 0
    %p63 = por %p61, %p62
    %p64 = scmp.ne.s32.totalorder %s56, %s58
    %p65 = scmp.eq.s32.totalorder %s13, 1
    %p66 = por %p64, %p65
    %p67 = scmp.ne.s32.totalorder %s58, %s59
    %p68 = scmp.eq.s32.totalorder %s13, 0
    %p69 = por %p67, %p68
    %p70 = scmp.ne.s32.totalorder %s58, %s59
    %p71 = scmp.eq.s32.totalorder %s14, 1
    %p72 = por %p70, %p71
    %p74 = scmp.ne.s32.totalorder %s59, %s73
    %p75 = scmp.eq.s32.totalorder %s14, 0
    %p76 = por %p74, %p75
    %s77 = ssub.s32 %s15, %s27
    %s78 = ssub.s32 %s16, %s23
    %s79 = sor.u32 %s77, %s78
    %p80 = scmp.eq.s32.totalorder %s79, 0
    %s82 = sadd.s32 %s81, 1
    %s83 = scalar_select %p80, %s81, %s82
    %p86 = pneg %p80
    %p87 = scmp.eq.s32.totalorder %s8, 1
    %p88 = por %p86, %p87
    %p89 = scmp.ne.s32.totalorder %s81, %s84
    %p90 = scmp.eq.s32.totalorder %s8, 0
    %p91 = por %p89, %p90
    %p92 = scmp.ne.s32.totalorder %s81, %s84
    %p93 = scmp.eq.s32.totalorder %s13, 1
    %p94 = por %p92, %p93
    %p95 = scmp.ne.s32.totalorder %s84, %s85
    %p96 = scmp.eq.s32.totalorder %s13, 0
    %p97 = por %p95, %p96
    %p98 = scmp.ne.s32.totalorder %s84, %s85
    %p99 = scmp.eq.s32.totalorder %s14, 1
    %p100 = por %p98, %p99
    %p102 = scmp.ne.s32.totalorder %s85, %s101
    %p103 = scmp.eq.s32.totalorder %s14, 0
    %p104 = por %p102, %p103
    %p105 = scmp.le.s32.totalorder 1, %s8
    %p106 = scmp.lt.s32.totalorder %s8, 3
    %p107 = pnand %p105, %p106
    %p108 = pneg %p107
    // Predicated region
    $region9: #{convolutional_block.3} parent=5 // pred_check
      _
    $region10: #{convolutional_block.3} parent=5 // pred_check_branch
      %110 = sbr.rel (%p107) target = $region12
    $region11: #{convolutional_block.3} parent=5 // pred_region
      %s111 = ssub.s32 %s8, 1
      // Predicated region
      $region13: #{convolutional_block.3} parent=11 // pred_check
        %p112 = pneg %p69
      $region14: #{convolutional_block.3} parent=11 // pred_check_branch
        %114 = sbr.rel (%p112) target = $region16
      $region15: #{convolutional_block.3} parent=11 // pred_region
        _
      $region16: #{convolutional_block.3} parent=11 // pred_fallthru
        _
    $region12: #{convolutional_block.3} parent=5 // pred_fallthru
      _
    %p115 = scmp.lt.s32.totalorder %s8, 2
    // Predicated region
    $region17: #{convolutional_block.3} parent=5 // pred_check
      %p116 = pneg %p115
    $region18: #{convolutional_block.3} parent=5 // pred_check_branch
      %118 = sbr.rel (%p116) target = $region20
    $region19: #{convolutional_block.3} parent=5 // pred_region
      // Predicated region
      $region21: #{convolutional_block.3} parent=19 // pred_check
        %p119 = pneg %p42
      $region22: #{convolutional_block.3} parent=19 // pred_check_branch
        %121 = sbr.rel (%p119) target = $region24
      $region23: #{convolutional_block.3} parent=19 // pred_region
        %p122 = scmp.lt.s32.totalorder %s15, 1
        %s123 = scalar_select %p122, %s15, 1
        %p124 = scmp.lt.s32.totalorder %s16, 0
        %s125 = scalar_select %p124, %s16, 0
        %s126 = smul.addr %s125, 9
        %s127 = smul.addr %s123, 9
        %s128 = sadd.s32 %s126, %s127
        %s129 = smul.addr %s128, 4
        %s130 = scalar_lea.vmem %s0, %s129
      $region24: #{convolutional_block.3} parent=19 // pred_fallthru
        _
    $region20: #{convolutional_block.3} parent=5 // pred_fallthru
      _
    %p131 = scmp.le.s32.totalorder 1, %s8
    %p132 = scmp.lt.s32.totalorder %s8, 3
    %p133 = pnand %p131, %p132
    %p134 = pneg %p133
    // Predicated region
    $region25: #{convolutional_block.3} parent=5 // pred_check
      _
    $region26: #{convolutional_block.3} parent=5 // pred_check_branch
      %136 = sbr.rel (%p133) target = $region28
    $region27: #{convolutional_block.3} parent=5 // pred_region
      %s137 = ssub.s32 %s8, 1
      %p138 = scmp.lt.s32.totalorder %s17, 1
      %s139 = scalar_select %p138, %s17, 1
      %p140 = scmp.lt.s32.totalorder %s18, 0
      %s141 = scalar_select %p140, %s18, 0
      %s142 = smul.addr %s141, 9
      %s143 = smul.addr %s139, 9
      %s144 = sadd.s32 %s142, %s143
      %s145 = smul.addr %s144, 4
      %s146 = scalar_lea.vmem %s0, %s145
      %p147 = pneg %p48
      %p148 = pneg %p45
      %p149 = pneg %p69
      %p150 = pneg %p66
      %p151 = pneg %p97
      %p152 = pneg %p94
      %p153 = scmp.lt.s32.totalorder %s17, 1
      %s154 = scalar_select %p153, %s17, 1
      %p155 = scmp.lt.s32.totalorder %s18, 0
      %s156 = scalar_select %p155, %s18, 0
      %s157 = smul.addr %s156, 9
      %s158 = smul.addr %s154, 9
      %s159 = sadd.s32 %s157, %s158
      %s160 = smul.addr %s159, 4
      %s161 = scalar_lea.vmem %s2, %s160
      %p162 = scmp.lt.s32.totalorder %s17, 1
      %s163 = scalar_select %p162, %s17, 1
      %p164 = scmp.lt.s32.totalorder %s18, 0
      %s165 = scalar_select %p164, %s18, 0
      %s166 = smul.addr %s165, 9
      %s167 = smul.addr %s163, 9
      %s168 = sadd.s32 %s166, %s167
      %s169 = smul.addr %s168, 4
      %s170 = scalar_lea.vmem %s0, %s169
      %p171 = scmp.lt.s32.totalorder %s17, 1
      %s172 = scalar_select %p171, %s17, 1
      %p173 = scmp.lt.s32.totalorder %s18, 0
      %s174 = scalar_select %p173, %s18, 0
      %s175 = smul.addr %s174, 9
      %s176 = smul.addr %s172, 9
      %s177 = sadd.s32 %s175, %s176
      %s178 = smul.addr %s177, 4
      %s179 = scalar_lea.vmem %s2, %s178
      %v180 = vld [vmem:[%s170] sm:$0xf]
      %v181 = vld [vmem:[%s170 + $0x4] sm:$0xf]
      %v182 = vld [vmem:[%s170 + $0x8] sm:$0xf]
      %v183 = vld [vmem:[%s170 + $0xc] sm:$0xf]
      %v184 = vld [vmem:[%s170 + $0x10] sm:$0xf]
      %v185 = vld [vmem:[%s170 + $0x14] sm:$0xf]
      %v186 = vld [vmem:[%s170 + $0x18] sm:$0xf]
      %v187 = vld [vmem:[%s170 + $0x1c] sm:$0xf]
      %v188 = vld [vmem:[%s170 + $0x20] sm:$0xf]
      %v189 = vunpack.c.l.bf16 %v180
      %v190 = vunpack.c.l.bf16 %v181
      %v191 = vunpack.c.l.bf16 %v182
      %v192 = vunpack.c.l.bf16 %v183
      %v193 = vunpack.c.l.bf16 %v184
      %v194 = vunpack.c.l.bf16 %v185
      %v195 = vunpack.c.l.bf16 %v186
      %v196 = vunpack.c.l.bf16 %v187
      %v197 = vunpack.c.l.bf16 %v188
      %v198 = vld [vmem:[%s1] sm:$0x1]
      %v199 = vlaneseq
      %v200 = vshrl.u32 %v199, 7
      %v201 = vsub.s32 0, %v200
      %v202 = vrot.slane %v198, %v201
      %v203 = vmul.f32 %v189, %v202
      %v204 = vmul.f32 %v190, %v202
      %v205 = vmul.f32 %v191, %v202
      %v206 = vmul.f32 %v192, %v202
      %v207 = vmul.f32 %v193, %v202
      %v208 = vmul.f32 %v194, %v202
      %v209 = vmul.f32 %v195, %v202
      %v210 = vmul.f32 %v196, %v202
      %v211 = vmul.f32 %v197, %v202
      %v212 = vld [vmem:[%s1 + $0x1] sm:$0x1]
      %v213 = vlaneseq
      %v214 = vshrl.u32 %v213, 7
      %v215 = vsub.s32 0, %v214
      %v216 = vrot.slane %v212, %v215
      %v217 = vadd.f32 %v203, %v216
      %v218 = vadd.f32 %v204, %v216
      %v219 = vadd.f32 %v205, %v216
      %v220 = vadd.f32 %v206, %v216
      %v221 = vadd.f32 %v207, %v216
      %v222 = vadd.f32 %v208, %v216
      %v223 = vadd.f32 %v209, %v216
      %v224 = vadd.f32 %v210, %v216
      %v225 = vadd.f32 %v211, %v216
      %vm226 = vcmp.ge.f32.partialorder %v217, 0.0
      %vm227 = vcmp.ge.f32.partialorder %v218, 0.0
      %vm228 = vcmp.ge.f32.partialorder %v219, 0.0
      %vm229 = vcmp.ge.f32.partialorder %v220, 0.0
      %vm230 = vcmp.ge.f32.partialorder %v221, 0.0
      %vm231 = vcmp.ge.f32.partialorder %v222, 0.0
      %vm232 = vcmp.ge.f32.partialorder %v223, 0.0
      %vm233 = vcmp.ge.f32.partialorder %v224, 0.0
      %vm234 = vcmp.ge.f32.partialorder %v225, 0.0
      %v235 = vmul.f32 %v217, 0.2
      %v236 = vmul.f32 %v218, 0.2
      %v237 = vmul.f32 %v219, 0.2
      %v238 = vmul.f32 %v220, 0.2
      %v239 = vmul.f32 %v221, 0.2
      %v240 = vmul.f32 %v222, 0.2
      %v241 = vmul.f32 %v223, 0.2
      %v242 = vmul.f32 %v224, 0.2
      %v243 = vmul.f32 %v225, 0.2
      %v244 = vsel %vm226, %v217, %v235
      %v245 = vsel %vm227, %v218, %v236
      %v246 = vsel %vm228, %v219, %v237
      %v247 = vsel %vm229, %v220, %v238
      %v248 = vsel %vm230, %v221, %v239
      %v249 = vsel %vm231, %v222, %v240
      %v250 = vsel %vm232, %v223, %v241
      %v251 = vsel %vm233, %v224, %v242
      %v252 = vsel %vm234, %v225, %v243
      %v253 = vpack.c.bf16 %v245, %v244
      %v254 = vpack.c.bf16 %v247, %v246
      %v255 = vpack.c.bf16 %v249, %v248
      %v256 = vpack.c.bf16 %v251, %v250
      %v257 = vpack.c.bf16 %v252, %v252
      %v263 = vunpack.c.l.b16 %v253
      %v264 = vunpack.c.h.b16 %v253
      %v265 = vunpack.c.l.b16 %v254
      %v266 = vunpack.c.h.b16 %v254
      %v267 = vunpack.c.l.b16 %v255
      %v268 = vunpack.c.h.b16 %v255
      %v269 = vunpack.c.l.b16 %v256
      %v270 = vunpack.c.h.b16 %v256
      %v271 = vunpack.c.l.b16 %v257
      %v272 = vpack.c.b16 %v263, %v263
      %v273 = vpack.c.b16 %v264, %v264
      %v274 = vpack.c.b16 %v265, %v265
      %v275 = vpack.c.b16 %v266, %v266
      %v276 = vpack.c.b16 %v267, %v267
      %v277 = vpack.c.b16 %v268, %v268
      %v278 = vpack.c.b16 %v269, %v269
      %v279 = vpack.c.b16 %v270, %v270
      %v280 = vpack.c.b16 %v271, %v271
      %vm290 = vcmask 60416
      %291 = vst.msk [vmem:[%s179] sm:$0xf] %vm290, %v272
      %292 = vst.msk [vmem:[%s179 + $0x4] sm:$0xf] %vm290, %v273
      %293 = vst.msk [vmem:[%s179 + $0x8] sm:$0xf] %vm290, %v274
      %294 = vst.msk [vmem:[%s179 + $0xc] sm:$0xf] %vm290, %v275
      %295 = vst.msk [vmem:[%s179 + $0x10] sm:$0xf] %vm290, %v276
      %296 = vst.msk [vmem:[%s179 + $0x14] sm:$0xf] %vm290, %v277
      %297 = vst.msk [vmem:[%s179 + $0x18] sm:$0xf] %vm290, %v278
      %298 = vst.msk [vmem:[%s179 + $0x1c] sm:$0xf] %vm290, %v279
      %299 = vst.msk [vmem:[%s179 + $0x20] sm:$0xf] %vm290, %v280
      %p300 = scmp.lt.s32.totalorder %s17, 1
      %s301 = scalar_select %p300, %s17, 1
      %p302 = scmp.lt.s32.totalorder %s18, 0
      %s303 = scalar_select %p302, %s18, 0
      %s304 = smul.addr %s303, 9
      %s305 = smul.addr %s301, 9
      %s306 = sadd.s32 %s304, %s305
      %s307 = smul.addr %s306, 4
      %s308 = scalar_lea.vmem %s2, %s307
      // Predicated region
      $region29: #{convolutional_block.3} parent=27 // pred_check
        %p309 = pneg %p94
      $region30: #{convolutional_block.3} parent=27 // pred_check_branch
        %311 = sbr.rel (%p309) target = $region32
      $region31: #{convolutional_block.3} parent=27 // pred_region
        _
      $region32: #{convolutional_block.3} parent=27 // pred_fallthru
        _
    $region28: #{convolutional_block.3} parent=5 // pred_fallthru
      _
    %p312 = scmp.le.s32.totalorder 2, %s8
    // Predicated region
    $region33: #{convolutional_block.3} parent=5 // pred_check
      %p313 = pneg %p312
    $region34: #{convolutional_block.3} parent=5 // pred_check_branch
      %315 = sbr.rel (%p313) target = $region36
    $region35: #{convolutional_block.3} parent=5 // pred_region
      %s316 = ssub.s32 %s8, 2
      // Predicated region
      $region37: #{convolutional_block.3} parent=35 // pred_check
        %p317 = pneg %p100
      $region38: #{convolutional_block.3} parent=35 // pred_check_branch
        %319 = sbr.rel (%p317) target = $region40
      $region39: #{convolutional_block.3} parent=35 // pred_region
        %p320 = scmp.lt.s32.totalorder %s19, 1
        %s321 = scalar_select %p320, %s19, 1
        %p322 = scmp.lt.s32.totalorder %s20, 0
        %s323 = scalar_select %p322, %s20, 0
        %s324 = smul.addr %s323, 9
        %s325 = smul.addr %s321, 9
        %s326 = sadd.s32 %s324, %s325
        %s327 = smul.addr %s326, 4
        %s328 = scalar_lea.vmem %s2, %s327
      $region40: #{convolutional_block.3} parent=35 // pred_fallthru
        _
    $region36: #{convolutional_block.3} parent=5 // pred_fallthru
      _
  $region6: #{convolutional_block.3} parent=0 // loop_footer
    %s12 = sadd.s32 1, %s8
  $region7: #{convolutional_block.3} parent=0 // loop_footer_branch
    %7 = sbr.rel target = $region3
  $region8: #{convolutional_block.3} parent=0 // loop_exit
    _

// kernel: convolutional_block.2
$region0: #{convolutional_block.2}
  #allocation0 [shape = 'u32[]', space=smem, size = 0x4, offset = 0x4, fixed_abs, tag = 'smem constant byte address 0x4 - core index']
  #allocation1 [shape = 'u32[144,128]{1,0:T(1,128)}', space=vmem, size = 0x12000, scoped, tag = 'internal scratch']
  %s0 = inlined_call_operand.vmem [shape: bf16[2,1,4,82,4], index: 0, kind: input, shape index: {}]
  %s1 = inlined_call_operand.vmem [shape: bf16[9,4,8], index: 1, kind: input, shape index: {}]
  %s2 = inlined_call_operand.vmem [shape: bf16[2,1,72,8], index: 2, kind: output, shape index: {0}]
  %s3 = inlined_call_operand.vmem [shape: f32[2,1,2,8], index: 3, kind: output, shape index: {1}]
  %4 = xla_tuple %s2, %s3
  %s5 = sld [smem:[#allocation0]]
  $region49: #{convolutional_block.2} parent=0
    _
  %s7 = ssub.s32 1, %s5
  %s8 = scalar_select 0, %s7, %s5
  loop: start=0, step=1, limit=4
  $region2: #{convolutional_block.2} parent=0 // loop_pre_header
    _
  $region3: #{convolutional_block.2} parent=0 // loop_header
    %s10 = sphi 0, %s14
    %p11 = scmp.ge.s32.totalorder %s10, 4
    %s17 = sphi 0, %s29
    %s18 = sphi 0, %s25
    %s19 = sphi 0, %s17
    %s20 = sphi 0, %s18
    %s21 = sphi 0, %s19
    %s22 = sphi 0, %s20
    %s34 = sphi 0, %s36
    %s37 = sphi 0, %s34
    %s38 = sphi 0, %s37
    %s54 = sphi 0, %s38
    %s58 = sphi 0, %s58
    %s60 = sphi 0, %s58
    %s61 = sphi 0, %s60
    %s75 = sphi 0, %s61
    %s83 = sphi 0, %s85
    %s86 = sphi 0, %s83
    %s87 = sphi 0, %s86
    %s103 = sphi 0, %s87
    %s111 = sphi 0, %s113
    %s114 = sphi 0, %s111
    %s115 = sphi 0, %s114
    %s131 = sphi 0, %s115
  $region4: #{convolutional_block.2} parent=0 // loop_header_branch
    %13 = sbr.rel (%p11) target = $region8
  $region5: #{convolutional_block.2} parent=0 // loop_body
    %s15 = ssub.s32 %s10, 1
    %s16 = ssub.s32 %s10, 2
    %s23 = sadd.s32 1, %s18
    %p24 = scmp.ge.s32.totalorder %s23, 1
    %s25 = scalar_select %p24, 0, %s23
    %s26 = sadd.s32 1, %s17
    %s27 = scalar_select %p24, %s26, %s17
    %p28 = scmp.ge.s32.totalorder %s27, 2
    %s29 = scalar_select %p28, 0, %s27
    %s30 = ssub.s32 %s17, %s29
    %s31 = ssub.s32 %s18, %s25
    %s32 = sor.u32 %s30, %s31
    %p33 = scmp.eq.s32.totalorder %s32, 0
    %s35 = sadd.s32 %s34, 1
    %s36 = scalar_select %p33, %s34, %s35
    %p39 = pneg %p33
    %p40 = scmp.eq.s32.totalorder %s10, 1
    %p41 = por %p39, %p40
    %p42 = scmp.ne.s32.totalorder %s34, %s37
    %p43 = scmp.eq.s32.totalorder %s10, 0
    %p44 = por %p42, %p43
    %p45 = scmp.ne.s32.totalorder %s34, %s37
    %p46 = scmp.eq.s32.totalorder %s15, 1
    %p47 = por %p45, %p46
    %p48 = scmp.ne.s32.totalorder %s37, %s38
    %p49 = scmp.eq.s32.totalorder %s15, 0
    %p50 = por %p48, %p49
    %p51 = scmp.ne.s32.totalorder %s37, %s38
    %p52 = scmp.eq.s32.totalorder %s16, 1
    %p53 = por %p51, %p52
    %p55 = scmp.ne.s32.totalorder %s38, %s54
    %p56 = scmp.eq.s32.totalorder %s16, 0
    %p57 = por %p55, %p56
    %s59 = sadd.s32 %s58, 1
    %p62 = scmp.eq.s32.totalorder %s10, 1
    %p63 = scmp.ne.s32.totalorder %s58, %s60
    %p64 = scmp.eq.s32.totalorder %s10, 0
    %p65 = por %p63, %p64
    %p66 = scmp.ne.s32.totalorder %s58, %s60
    %p67 = scmp.eq.s32.totalorder %s15, 1
    %p68 = por %p66, %p67
    %p69 = scmp.ne.s32.totalorder %s60, %s61
    %p70 = scmp.eq.s32.totalorder %s15, 0
    %p71 = por %p69, %p70
    %p72 = scmp.ne.s32.totalorder %s60, %s61
    %p73 = scmp.eq.s32.totalorder %s16, 1
    %p74 = por %p72, %p73
    %p76 = scmp.ne.s32.totalorder %s61, %s75
    %p77 = scmp.eq.s32.totalorder %s16, 0
    %p78 = por %p76, %p77
    %s79 = ssub.s32 %s17, %s29
    %s80 = ssub.s32 %s18, %s25
    %s81 = sor.u32 %s79, %s80
    %p82 = scmp.eq.s32.totalorder %s81, 0
    %s84 = sadd.s32 %s83, 1
    %s85 = scalar_select %p82, %s83, %s84
    %p88 = pneg %p82
    %p89 = scmp.eq.s32.totalorder %s10, 1
    %p90 = por %p88, %p89
    %p91 = scmp.ne.s32.totalorder %s83, %s86
    %p92 = scmp.eq.s32.totalorder %s10, 0
    %p93 = por %p91, %p92
    %p94 = scmp.ne.s32.totalorder %s83, %s86
    %p95 = scmp.eq.s32.totalorder %s15, 1
    %p96 = por %p94, %p95
    %p97 = scmp.ne.s32.totalorder %s86, %s87
    %p98 = scmp.eq.s32.totalorder %s15, 0
    %p99 = por %p97, %p98
    %p100 = scmp.ne.s32.totalorder %s86, %s87
    %p101 = scmp.eq.s32.totalorder %s16, 1
    %p102 = por %p100, %p101
    %p104 = scmp.ne.s32.totalorder %s87, %s103
    %p105 = scmp.eq.s32.totalorder %s16, 0
    %p106 = por %p104, %p105
    %s107 = ssub.s32 %s17, %s29
    %s108 = ssub.s32 %s18, %s25
    %s109 = sor.u32 %s107, %s108
    %p110 = scmp.eq.s32.totalorder %s109, 0
    %s112 = sadd.s32 %s111, 1
    %s113 = scalar_select %p110, %s111, %s112
    %p116 = pneg %p110
    %p117 = scmp.eq.s32.totalorder %s10, 1
    %p118 = por %p116, %p117
    %p119 = scmp.ne.s32.totalorder %s111, %s114
    %p120 = scmp.eq.s32.totalorder %s10, 0
    %p121 = por %p119, %p120
    %p122 = scmp.ne.s32.totalorder %s111, %s114
    %p123 = scmp.eq.s32.totalorder %s15, 1
    %p124 = por %p122, %p123
    %p125 = scmp.ne.s32.totalorder %s114, %s115
    %p126 = scmp.eq.s32.totalorder %s15, 0
    %p127 = por %p125, %p126
    %p128 = scmp.ne.s32.totalorder %s114, %s115
    %p129 = scmp.eq.s32.totalorder %s16, 1
    %p130 = por %p128, %p129
    %p132 = scmp.ne.s32.totalorder %s115, %s131
    %p133 = scmp.eq.s32.totalorder %s16, 0
    %p134 = por %p132, %p133
    %p135 = scmp.le.s32.totalorder 1, %s10
    %p136 = scmp.lt.s32.totalorder %s10, 3
    %p137 = pnand %p135, %p136
    %p138 = pneg %p137
    // Predicated region
    $region9: #{convolutional_block.2} parent=5 // pred_check
      _
    $region10: #{convolutional_block.2} parent=5 // pred_check_branch
      %140 = sbr.rel (%p137) target = $region12
    $region11: #{convolutional_block.2} parent=5 // pred_region
      %s141 = ssub.s32 %s10, 1
      // Predicated region
      $region13: #{convolutional_block.2} parent=11 // pred_check
        %p142 = pneg %p71
      $region14: #{convolutional_block.2} parent=11 // pred_check_branch
        %144 = sbr.rel (%p142) target = $region16
      $region15: #{convolutional_block.2} parent=11 // pred_region
        _
      $region16: #{convolutional_block.2} parent=11 // pred_fallthru
        _
    $region12: #{convolutional_block.2} parent=5 // pred_fallthru
      _
    %p145 = scmp.lt.s32.totalorder %s10, 2
    // Predicated region
    $region17: #{convolutional_block.2} parent=5 // pred_check
      %p146 = pneg %p145
    $region18: #{convolutional_block.2} parent=5 // pred_check_branch
      %148 = sbr.rel (%p146) target = $region20
    $region19: #{convolutional_block.2} parent=5 // pred_region
      // Predicated region
      $region21: #{convolutional_block.2} parent=19 // pred_check
        %p149 = pneg %p44
      $region22: #{convolutional_block.2} parent=19 // pred_check_branch
        %151 = sbr.rel (%p149) target = $region24
      $region23: #{convolutional_block.2} parent=19 // pred_region
        %p152 = scmp.lt.s32.totalorder %s17, 1
        %s153 = scalar_select %p152, %s17, 1
        %p154 = scmp.lt.s32.totalorder %s18, 0
        %s155 = scalar_select %p154, %s18, 0
        %s156 = smul.addr %s155, 44
        %s157 = smul.addr %s153, 44
        %s158 = sadd.s32 %s156, %s157
        %s159 = smul.addr %s158, 4
        %s160 = scalar_lea.vmem %s0, %s159
      $region24: #{convolutional_block.2} parent=19 // pred_fallthru
        _
    $region20: #{convolutional_block.2} parent=5 // pred_fallthru
      _
    %p161 = scmp.le.s32.totalorder 1, %s10
    %p162 = scmp.lt.s32.totalorder %s10, 3
    %p163 = pnand %p161, %p162
    %p164 = pneg %p163
    // Predicated region
    $region25: #{convolutional_block.2} parent=5 // pred_check
      _
    $region26: #{convolutional_block.2} parent=5 // pred_check_branch
      %166 = sbr.rel (%p163) target = $region28
    $region27: #{convolutional_block.2} parent=5 // pred_region
      %s167 = ssub.s32 %s10, 1
      %p168 = scmp.lt.s32.totalorder %s19, 1
      %s169 = scalar_select %p168, %s19, 1
      %p170 = scmp.lt.s32.totalorder %s20, 0
      %s171 = scalar_select %p170, %s20, 0
      %s172 = smul.addr %s171, 44
      %s173 = smul.addr %s169, 44
      %s174 = sadd.s32 %s172, %s173
      %s175 = smul.addr %s174, 4
      %s176 = scalar_lea.vmem %s0, %s175
      %p177 = pneg %p50
      %p178 = pneg %p47
      %p179 = pneg %p71
      %p180 = pneg %p68
      %p181 = pneg %p99
      %p182 = pneg %p96
      %p183 = scmp.lt.s32.totalorder %s19, 1
      %s184 = scalar_select %p183, %s19, 1
      %p185 = scmp.lt.s32.totalorder %s20, 0
      %s186 = scalar_select %p185, %s20, 0
      %s187 = smul.addr %s186, 9
      %s188 = smul.addr %s184, 9
      %s189 = sadd.s32 %s187, %s188
      %s190 = smul.addr %s189, 4
      %s191 = scalar_lea.vmem %s2, %s190
      %p192 = pneg %p127
      %p193 = pneg %p124
      %p194 = scmp.lt.s32.totalorder %s19, 1
      %s195 = scalar_select %p194, %s19, 1
      %p196 = scmp.lt.s32.totalorder %s20, 0
      %s197 = scalar_select %p196, %s20, 0
      %s198 = sadd.s32 %s197, %s195
      %s199 = smul.addr %s198, 2
      %s200 = scalar_lea.vmem %s3, %s199
      %p201 = scmp.lt.s32.totalorder %s19, 1
      %s202 = scalar_select %p201, %s19, 1
      %p203 = scmp.lt.s32.totalorder %s20, 0
      %s204 = scalar_select %p203, %s20, 0
      %s205 = smul.addr %s204, 44
      %s206 = smul.addr %s202, 44
      %s207 = sadd.s32 %s205, %s206
      %s208 = smul.addr %s207, 4
      %s209 = scalar_lea.vmem %s0, %s208
      %p210 = scmp.lt.s32.totalorder %s19, 1
      %s211 = scalar_select %p210, %s19, 1
      %p212 = scmp.lt.s32.totalorder %s20, 0
      %s213 = scalar_select %p212, %s20, 0
      %s214 = smul.addr %s213, 9
      %s215 = smul.addr %s211, 9
      %s216 = sadd.s32 %s214, %s215
      %s217 = smul.addr %s216, 4
      %s218 = scalar_lea.vmem %s2, %s217
      %p219 = scmp.lt.s32.totalorder %s19, 1
      %s220 = scalar_select %p219, %s19, 1
      %p221 = scmp.lt.s32.totalorder %s20, 0
      %s222 = scalar_select %p221, %s20, 0
      %s223 = sadd.s32 %s222, %s220
      %s224 = smul.addr %s223, 2
      %s225 = scalar_lea.vmem %s3, %s224
      %v227 = vld [vmem:[%s209] sm:$0xf]
      %v228 = vld [vmem:[%s209 + $0x4] sm:$0xf]
      %v229 = vld [vmem:[%s209 + $0x8] sm:$0xf]
      %v230 = vld [vmem:[%s209 + $0xc] sm:$0xf]
      %v231 = vld [vmem:[%s209 + $0x10] sm:$0xf]
      %v232 = vld [vmem:[%s209 + $0x14] sm:$0xf]
      %v233 = vld [vmem:[%s209 + $0x18] sm:$0xf]
      %v234 = vld [vmem:[%s209 + $0x1c] sm:$0xf]
      %v235 = vld [vmem:[%s209 + $0x20] sm:$0xf]
      %v236 = vld [vmem:[%s1] sm:$0x3]
      %s237 = scalar_lea.vmem %s209, 44
      %v238 = vld [vmem:[%s237] sm:$0xf]
      %v239 = vld [vmem:[%s237 + $0x4] sm:$0xf]
      %v240 = vld [vmem:[%s237 + $0x8] sm:$0xf]
      %v241 = vld [vmem:[%s237 + $0xc] sm:$0xf]
      %v242 = vld [vmem:[%s237 + $0x10] sm:$0xf]
      %v243 = vld [vmem:[%s237 + $0x14] sm:$0xf]
      %v244 = vld [vmem:[%s237 + $0x18] sm:$0xf]
      %v245 = vld [vmem:[%s237 + $0x1c] sm:$0xf]
      %v246 = vld [vmem:[%s237 + $0x20] sm:$0xf]
      %s247 = scalar_lea.vmem %s1, 2
      %v248 = vld [vmem:[%s247] sm:$0x3]
      %v258 = vunpack.c.l.b16 %v238
      %v259 = vunpack.c.l.b16 %v239
      %v260 = vunpack.c.l.b16 %v240
      %v261 = vunpack.c.l.b16 %v241
      %v262 = vunpack.c.l.b16 %v242
      %v263 = vunpack.c.l.b16 %v243
      %v264 = vunpack.c.l.b16 %v244
      %v265 = vunpack.c.l.b16 %v245
      %v266 = vunpack.c.l.b16 %v246
      %v267 = vpack.c.b16 %v259, %v258
      %v268 = vpack.c.b16 %v261, %v260
      %v269 = vpack.c.b16 %v263, %v262
      %v270 = vpack.c.b16 %v265, %v264
      %v271 = vpack.c.b16 %v266, %v266
      %vm272 = vcmask 31744
      %v274 = vsel %vm272, %v267, 0
      %v277 = vsel %vm272, %v268, 0
      %v280 = vsel %vm272, %v269, 0
      %v283 = vsel %vm272, %v270, 0
      %v286 = vsel %vm272, %v271, 0
      %vm288 = vcmask 1041408
      %v290 = vsel %vm288, %v248, 0
      %292 = vmatprep.subr.bf16.mxu0 0
      %293 = vmatpush1.bf16.msra.mxu0 %v290
      %294 = vmatprep.subr.bf16.mxu0 0
      %295 = vmatpush1.bf16.msra.mxu0 0
      %296 = vmatprep.subr.bf16.mxu0 0
      %297 = vmatpush1.bf16.msra.mxu0 0
      %298 = vmatprep.subr.bf16.mxu0 0
      %299 = vmatpush1.bf16.msra.mxu0 0
      %300 = vmatprep.subr.bf16.mxu0 0
      %301 = vmatpush1.bf16.msra.mxu0 0
      %302 = vmatprep.subr.bf16.mxu0 0
      %303 = vmatpush1.bf16.msra.mxu0 0
      %304 = vmatprep.subr.bf16.mxu0 0
      %305 = vmatpush1.bf16.msra.mxu0 0
      %306 = vmatprep.subr.bf16.mxu0 0
      %307 = vmatpush1.bf16.msra.mxu0 0
      %308 = vmatprep.subr.bf16.mxu0 0
      %309 = vmatpush1.bf16.msra.mxu0 0
      %310 = vmatprep.subr.bf16.mxu0 0
      %311 = vmatpush1.bf16.msra.mxu0 0
      %312 = vmatprep.subr.bf16.mxu0 0
      %313 = vmatpush1.bf16.msra.mxu0 0
      %314 = vmatprep.subr.bf16.mxu0 0
      %315 = vmatpush1.bf16.msra.mxu0 0
      %316 = vmatprep.subr.bf16.mxu0 0
      %317 = vmatpush1.bf16.msra.mxu0 0
      %318 = vmatprep.subr.bf16.mxu0 0
      %319 = vmatpush1.bf16.msra.mxu0 0
      %320 = vmatprep.subr.bf16.mxu0 0
      %321 = vmatpush1.bf16.msra.mxu0 0
      %322 = vmatprep.subr.bf16.mxu0 0
      %323 = vmatpush1.bf16.msra.mxu0 0
      %324 = vmatprep.mubr.bf16.mxu0 0
      %325 = vmatmul.mubr.bf16.gmra.mrb[0].mxu0 %v274
      %v326 = vpop.f32.mrb[0].mxu0
      %v327 = vadd.f32 0.0, %v326
      %v328 = vpop.f32.mrb[0].mxu0
      %v329 = vpop.f32.mrb[0].mxu0
      %v330 = vadd.f32 0.0, %v329
      %v331 = vpop.f32.mrb[0].mxu0
      %332 = vmatprep.mubr.bf16.mxu0 0
      %333 = vmatmul.mubr.bf16.gmra.mrb[0].mxu0 %v277
      %v334 = vpop.f32.mrb[0].mxu0
      %v335 = vadd.f32 0.0, %v334
      %v336 = vpop.f32.mrb[0].mxu0
      %v337 = vpop.f32.mrb[0].mxu0
      %v338 = vadd.f32 0.0, %v337
      %v339 = vpop.f32.mrb[0].mxu0
      %340 = vmatprep.mubr.bf16.mxu0 0
      %341 = vmatmul.mubr.bf16.gmra.mrb[0].mxu0 %v280
      %v342 = vpop.f32.mrb[0].mxu0
      %v343 = vadd.f32 0.0, %v342
      %v344 = vpop.f32.mrb[0].mxu0
      %v345 = vpop.f32.mrb[0].mxu0
      %v346 = vadd.f32 0.0, %v345
      %v347 = vpop.f32.mrb[0].mxu0
      %348 = vmatprep.mubr.bf16.mxu0 0
      %349 = vmatmul.mubr.bf16.gmra.mrb[0].mxu0 %v283
      %v350 = vpop.f32.mrb[0].mxu0
      %v351 = vadd.f32 0.0, %v350
      %v352 = vpop.f32.mrb[0].mxu0
      %v353 = vpop.f32.mrb[0].mxu0
      %v354 = vadd.f32 0.0, %v353
      %v355 = vpop.f32.mrb[0].mxu0
      %356 = vmatprep.mubr.bf16.mxu0 0
      %357 = vmatmul.mubr.bf16.gmra.mrb[0].mxu0 %v286
      %v358 = vpop.f32.mrb[0].mxu0
      %v359 = vadd.f32 0.0, %v358
      %v360 = vpop.f32.mrb[0].mxu0
      %v361 = vpop.f32.mrb[0].mxu0
      %v362 = vpop.f32.mrb[0].mxu0
      %363 = vdwg.mxu0
      %v373 = vunpack.c.l.b16 %v227
      %v374 = vunpack.c.l.b16 %v228
      %v375 = vunpack.c.l.b16 %v229
      %v376 = vunpack.c.l.b16 %v230
      %v377 = vunpack.c.l.b16 %v231
      %v378 = vunpack.c.l.b16 %v232
      %v379 = vunpack.c.l.b16 %v233
      %v380 = vunpack.c.l.b16 %v234
      %v381 = vunpack.c.l.b16 %v235
      %v382 = vpack.c.b16 %v374, %v373
      %v383 = vpack.c.b16 %v376, %v375
      %v384 = vpack.c.b16 %v378, %v377
      %v385 = vpack.c.b16 %v380, %v379
      %v386 = vpack.c.b16 %v381, %v381
      %v388 = vsel %vm272, %v382, 0
      %v391 = vsel %vm272, %v383, 0
      %v394 = vsel %vm272, %v384, 0
      %v397 = vsel %vm272, %v385, 0
      %v400 = vsel %vm272, %v386, 0
      %v403 = vsel %vm288, %v236, 0
      %405 = vmatprep.subr.bf16.mxu0 0
      %406 = vmatpush1.bf16.msra.mxu0 %v403
      %407 = vmatprep.subr.bf16.mxu0 0
      %408 = vmatpush1.bf16.msra.mxu0 0
      %409 = vmatprep.subr.bf16.mxu0 0
      %410 = vmatpush1.bf16.msra.mxu0 0
      %411 = vmatprep.subr.bf16.mxu0 0
      %412 = vmatpush1.bf16.msra.mxu0 0
      %413 = vmatprep.subr.bf16.mxu0 0
      %414 = vmatpush1.bf16.msra.mxu0 0
      %415 = vmatprep.subr.bf16.mxu0 0
      %416 = vmatpush1.bf16.msra.mxu0 0
      %417 = vmatprep.subr.bf16.mxu0 0
      %418 = vmatpush1.bf16.msra.mxu0 0
      %419 = vmatprep.subr.bf16.mxu0 0
      %420 = vmatpush1.bf16.msra.mxu0 0
      %421 = vmatprep.subr.bf16.mxu0 0
      %422 = vmatpush1.bf16.msra.mxu0 0
      %423 = vmatprep.subr.bf16.mxu0 0
      %424 = vmatpush1.bf16.msra.mxu0 0
      %425 = vmatprep.subr.bf16.mxu0 0
      %426 = vmatpush1.bf16.msra.mxu0 0
      %427 = vmatprep.subr.bf16.mxu0 0
      %428 = vmatpush1.bf16.msra.mxu0 0
      %429 = vmatprep.subr.bf16.mxu0 0
      %430 = vmatpush1.bf16.msra.mxu0 0
      %431 = vmatprep.subr.bf16.mxu0 0
      %432 = vmatpush1.bf16.msra.mxu0 0
      %433 = vmatprep.subr.bf16.mxu0 0
      %434 = vmatpush1.bf16.msra.mxu0 0
      %435 = vmatprep.subr.bf16.mxu0 0
      %436 = vmatpush1.bf16.msra.mxu0 0
      %437 = vmatprep.mubr.bf16.mxu0 0
      %438 = vmatmul.mubr.bf16.gmra.mrb[0].mxu0 %v388
      %v439 = vpop.f32.mrb[0].mxu0
      %v440 = vadd.f32 %v327, %v439
      %v441 = vpop.f32.mrb[0].mxu0
      %v442 = vpop.f32.mrb[0].mxu0
      %v443 = vadd.f32 %v330, %v442
      %v444 = vpop.f32.mrb[0].mxu0
      %445 = vmatprep.mubr.bf16.mxu0 0
      %446 = vmatmul.mubr.bf16.gmra.mrb[0].mxu0 %v391
      %v447 = vpop.f32.mrb[0].mxu0
      %v448 = vadd.f32 %v335, %v447
      %v449 = vpop.f32.mrb[0].mxu0
      %v450 = vpop.f32.mrb[0].mxu0
      %v451 = vadd.f32 %v338, %v450
      %v452 = vpop.f32.mrb[0].mxu0
      %453 = vmatprep.mubr.bf16.mxu0 0
      %454 = vmatmul.mubr.bf16.gmra.mrb[0].mxu0 %v394
      %v455 = vpop.f32.mrb[0].mxu0
      %v456 = vadd.f32 %v343, %v455
      %v457 = vpop.f32.mrb[0].mxu0
      %v458 = vpop.f32.mrb[0].mxu0
      %v459 = vadd.f32 %v346, %v458
      %v460 = vpop.f32.mrb[0].mxu0
      %461 = vmatprep.mubr.bf16.mxu0 0
      %462 = vmatmul.mubr.bf16.gmra.mrb[0].mxu0 %v397
      %v463 = vpop.f32.mrb[0].mxu0
      %v464 = vadd.f32 %v351, %v463
      %v465 = vpop.f32.mrb[0].mxu0
      %v466 = vpop.f32.mrb[0].mxu0
      %v467 = vadd.f32 %v354, %v466
      %v468 = vpop.f32.mrb[0].mxu0
      %469 = vmatprep.mubr.bf16.mxu0 0
      %470 = vmatmul.mubr.bf16.gmra.mrb[0].mxu0 %v400
      %v471 = vpop.f32.mrb[0].mxu0
      %v472 = vadd.f32 %v359, %v471
      %v473 = vpop.f32.mrb[0].mxu0
      %v474 = vpop.f32.mrb[0].mxu0
      %v475 = vpop.f32.mrb[0].mxu0
      %476 = vdwg.mxu0
      %v477 = vld [vmem:[%s209] sm:$0xf]
      %v478 = vld [vmem:[%s209 + $0x4] sm:$0xf]
      %v479 = vld [vmem:[%s209 + $0x8] sm:$0xf]
      %v480 = vld [vmem:[%s209 + $0xc] sm:$0xf]
      %v481 = vld [vmem:[%s209 + $0x10] sm:$0xf]
      %v482 = vld [vmem:[%s209 + $0x14] sm:$0xf]
      %v483 = vld [vmem:[%s209 + $0x18] sm:$0xf]
      %v484 = vld [vmem:[%s209 + $0x1c] sm:$0xf]
      %v485 = vld [vmem:[%s209 + $0x20] sm:$0xf]
      %v486 = vld [vmem:[%s209 + $0x24] sm:$0x1]
      %s487 = scalar_lea.vmem %s1, 4
      %v488 = vld [vmem:[%s487] sm:$0x3]
      %v499 = vunpack.c.l.b16 %v477
      %v500 = vunpack.c.l.b16 %v478
      %v501 = vunpack.c.l.b16 %v479
      %v502 = vunpack.c.l.b16 %v480
      %v503 = vunpack.c.l.b16 %v481
      %v504 = vunpack.c.l.b16 %v482
      %v505 = vunpack.c.l.b16 %v483
      %v506 = vunpack.c.l.b16 %v484
      %v507 = vunpack.c.l.b16 %v485
      %v508 = vunpack.c.l.b16 %v486
      %v509 = vpack.c.b16 %v500, %v499
      %v510 = vpack.c.b16 %v502, %v501
      %v511 = vpack.c.b16 %v504, %v503
      %v512 = vpack.c.b16 %v506, %v505
      %v513 = vpack.c.b16 %v508, %v507
      %vm514 = vsmask.f32 7424
      %v516 = vshrl.u32 %v509, 16
      %v518 = vshll.u32 %v509, 16
      %v520 = vrot.slane %v518, 1
      %v521 = vor.u32 %v516, %v520
      %v523 = vshll.u32 %v510, 16
      %v525 = vrot.slane %v523, 1
      %v526 = vsel %vm514, %v521, %v525
      %v527 = vshrl.u32 %v510, 16
      %v529 = vor.u32 %v527, %v525
      %v531 = vshll.u32 %v511, 16
      %v533 = vrot.slane %v531, 1
      %v534 = vsel %vm514, %v529, %v533
      %v535 = vshrl.u32 %v511, 16
      %v537 = vor.u32 %v535, %v533
      %v539 = vshll.u32 %v512, 16
      %v541 = vrot.slane %v539, 1
      %v542 = vsel %vm514, %v537, %v541
      %v543 = vshrl.u32 %v512, 16
      %v545 = vor.u32 %v543, %v541
      %v547 = vshll.u32 %v513, 16
      %v549 = vrot.slane %v547, 1
      %v550 = vsel %vm514, %v545, %v549
      %v551 = vshrl.u32 %v513, 16
      %v553 = vor.u32 %v551, %v549
      %v555 = vsel %vm272, %v526, 0
      %v558 = vsel %vm272, %v534, 0
      %v561 = vsel %vm272, %v542, 0
      %v564 = vsel %vm272, %v550, 0
      %v567 = vsel %vm272, %v553, 0
      %v570 = vsel %vm288, %v488, 0
      %572 = vmatprep.subr.bf16.mxu0 0
      %573 = vmatpush1.bf16.msra.mxu0 %v570
      %574 = vmatprep.subr.bf16.mxu0 0
      %575 = vmatpush1.bf16.msra.mxu0 0
      %576 = vmatprep.subr.bf16.mxu0 0
      %577 = vmatpush1.bf16.msra.mxu0 0
      %578 = vmatprep.subr.bf16.mxu0 0
      %579 = vmatpush1.bf16.msra.mxu0 0
      %580 = vmatprep.subr.bf16.mxu0 0
      %581 = vmatpush1.bf16.msra.mxu0 0
      %582 = vmatprep.subr.bf16.mxu0 0
      %583 = vmatpush1.bf16.msra.mxu0 0
      %584 = vmatprep.subr.bf16.mxu0 0
      %585 = vmatpush1.bf16.msra.mxu0 0
      %586 = vmatprep.subr.bf16.mxu0 0
      %587 = vmatpush1.bf16.msra.mxu0 0
      %588 = vmatprep.subr.bf16.mxu0 0
      %589 = vmatpush1.bf16.msra.mxu0 0
      %590 = vmatprep.subr.bf16.mxu0 0
      %591 = vmatpush1.bf16.msra.mxu0 0
      %592 = vmatprep.subr.bf16.mxu0 0
      %593 = vmatpush1.bf16.msra.mxu0 0
      %594 = vmatprep.subr.bf16.mxu0 0
      %595 = vmatpush1.bf16.msra.mxu0 0
      %596 = vmatprep.subr.bf16.mxu0 0
      %597 = vmatpush1.bf16.msra.mxu0 0
      %598 = vmatprep.subr.bf16.mxu0 0
      %599 = vmatpush1.bf16.msra.mxu0 0
      %600 = vmatprep.subr.bf16.mxu0 0
      %601 = vmatpush1.bf16.msra.mxu0 0
      %602 = vmatprep.subr.bf16.mxu0 0
      %603 = vmatpush1.bf16.msra.mxu0 0
      %604 = vmatprep.mubr.bf16.mxu0 0
      %605 = vmatmul.mubr.bf16.gmra.mrb[0].mxu0 %v555
      %v606 = vpop.f32.mrb[0].mxu0
      %v607 = vadd.f32 0.0, %v606
      %v608 = vpop.f32.mrb[0].mxu0
      %v609 = vpop.f32.mrb[0].mxu0
      %v610 = vadd.f32 0.0, %v609
      %v611 = vpop.f32.mrb[0].mxu0
      %612 = vmatprep.mubr.bf16.mxu0 0
      %613 = vmatmul.mubr.bf16.gmra.mrb[0].mxu0 %v558
      %v614 = vpop.f32.mrb[0].mxu0
      %v615 = vadd.f32 0.0, %v614
      %v616 = vpop.f32.mrb[0].mxu0
      %v617 = vpop.f32.mrb[0].mxu0
      %v618 = vadd.f32 0.0, %v617
      %v619 = vpop.f32.mrb[0].mxu0
      %620 = vmatprep.mubr.bf16.mxu0 0
      %621 = vmatmul.mubr.bf16.gmra.mrb[0].mxu0 %v561
      %v622 = vpop.f32.mrb[0].mxu0
      %v623 = vadd.f32 0.0, %v622
      %v624 = vpop.f32.mrb[0].mxu0
      %v625 = vpop.f32.mrb[0].mxu0
      %v626 = vadd.f32 0.0, %v625
      %v627 = vpop.f32.mrb[0].mxu0
      %628 = vmatprep.mubr.bf16.mxu0 0
      %629 = vmatmul.mubr.bf16.gmra.mrb[0].mxu0 %v564
      %v630 = vpop.f32.mrb[0].mxu0
      %v631 = vadd.f32 0.0, %v630
      %v632 = vpop.f32.mrb[0].mxu0
      %v633 = vpop.f32.mrb[0].mxu0
      %v634 = vadd.f32 0.0, %v633
      %v635 = vpop.f32.mrb[0].mxu0
      %636 = vmatprep.mubr.bf16.mxu0 0
      %637 = vmatmul.mubr.bf16.gmra.mrb[0].mxu0 %v567
      %v638 = vpop.f32.mrb[0].mxu0
      %v639 = vadd.f32 0.0, %v638
      %v640 = vpop.f32.mrb[0].mxu0
      %v641 = vpop.f32.mrb[0].mxu0
      %v642 = vpop.f32.mrb[0].mxu0
      %643 = vdwg.mxu0
      %v644 = vadd.f32 %v440, %v607
      %v645 = vadd.f32 %v443, %v610
      %v646 = vadd.f32 %v448, %v615
      %v647 = vadd.f32 %v451, %v618
      %v648 = vadd.f32 %v456, %v623
      %v649 = vadd.f32 %v459, %v626
      %v650 = vadd.f32 %v464, %v631
      %v651 = vadd.f32 %v467, %v634
      %v652 = vadd.f32 %v472, %v639
      %s653 = scalar_lea.vmem %s209, 88
      %v654 = vld [vmem:[%s653] sm:$0xf]
      %v655 = vld [vmem:[%s653 + $0x4] sm:$0xf]
      %v656 = vld [vmem:[%s653 + $0x8] sm:$0xf]
      %v657 = vld [vmem:[%s653 + $0xc] sm:$0xf]
      %v658 = vld [vmem:[%s653 + $0x10] sm:$0xf]
      %v659 = vld [vmem:[%s653 + $0x14] sm:$0xf]
      %v660 = vld [vmem:[%s653 + $0x18] sm:$0xf]
      %v661 = vld [vmem:[%s653 + $0x1c] sm:$0xf]
      %v662 = vld [vmem:[%s653 + $0x20] sm:$0xf]
      %s663 = scalar_lea.vmem %s1, 6
      %v664 = vld [vmem:[%s663] sm:$0x3]
      %v674 = vunpack.c.l.b16 %v654
      %v675 = vunpack.c.l.b16 %v655
      %v676 = vunpack.c.l.b16 %v656
      %v677 = vunpack.c.l.b16 %v657
      %v678 = vunpack.c.l.b16 %v658
      %v679 = vunpack.c.l.b16 %v659
      %v680 = vunpack.c.l.b16 %v660
      %v681 = vunpack.c.l.b16 %v661
      %v682 = vunpack.c.l.b16 %v662
      %v683 = vpack.c.b16 %v675, %v674
      %v684 = vpack.c.b16 %v677, %v676
      %v685 = vpack.c.b16 %v679, %v678
      %v686 = vpack.c.b16 %v681, %v680
      %v687 = vpack.c.b16 %v682, %v682
      %v689 = vsel %vm272, %v683, 0
      %v692 = vsel %vm272, %v684, 0
      %v695 = vsel %vm272, %v685, 0
      %v698 = vsel %vm272, %v686, 0
      %v701 = vsel %vm272, %v687, 0
      %v704 = vsel %vm288, %v664, 0
      %706 = vmatprep.subr.bf16.mxu0 0
      %707 = vmatpush1.bf16.msra.mxu0 %v704
      %708 = vmatprep.subr.bf16.mxu0 0
      %709 = vmatpush1.bf16.msra.mxu0 0
      %710 = vmatprep.subr.bf16.mxu0 0
      %711 = vmatpush1.bf16.msra.mxu0 0
      %712 = vmatprep.subr.bf16.mxu0 0
      %713 = vmatpush1.bf16.msra.mxu0 0
      %714 = vmatprep.subr.bf16.mxu0 0
      %715 = vmatpush1.bf16.msra.mxu0 0
      %716 = vmatprep.subr.bf16.mxu0 0
      %717 = vmatpush1.bf16.msra.mxu0 0
      %718 = vmatprep.subr.bf16.mxu0 0
      %719 = vmatpush1.bf16.msra.mxu0 0
      %720 = vmatprep.subr.bf16.mxu0 0
      %721 = vmatpush1.bf16.msra.mxu0 0
      %722 = vmatprep.subr.bf16.mxu0 0
      %723 = vmatpush1.bf16.msra.mxu0 0
      %724 = vmatprep.subr.bf16.mxu0 0
      %725 = vmatpush1.bf16.msra.mxu0 0
      %726 = vmatprep.subr.bf16.mxu0 0
      %727 = vmatpush1.bf16.msra.mxu0 0
      %728 = vmatprep.subr.bf16.mxu0 0
      %729 = vmatpush1.bf16.msra.mxu0 0
      %730 = vmatprep.subr.bf16.mxu0 0
      %731 = vmatpush1.bf16.msra.mxu0 0
      %732 = vmatprep.subr.bf16.mxu0 0
      %733 = vmatpush1.bf16.msra.mxu0 0
      %734 = vmatprep.subr.bf16.mxu0 0
      %735 = vmatpush1.bf16.msra.mxu0 0
      %736 = vmatprep.subr.bf16.mxu0 0
      %737 = vmatpush1.bf16.msra.mxu0 0
      %738 = vmatprep.mubr.bf16.mxu0 0
      %739 = vmatmul.mubr.bf16.gmra.mrb[0].mxu0 %v689
      %v740 = vpop.f32.mrb[0].mxu0
      %v741 = vadd.f32 0.0, %v740
      %v742 = vpop.f32.mrb[0].mxu0
      %v743 = vpop.f32.mrb[0].mxu0
      %v744 = vadd.f32 0.0, %v743
      %v745 = vpop.f32.mrb[0].mxu0
      %746 = vmatprep.mubr.bf16.mxu0 0
      %747 = vmatmul.mubr.bf16.gmra.mrb[0].mxu0 %v692
      %v748 = vpop.f32.mrb[0].mxu0
      %v749 = vadd.f32 0.0, %v748
      %v750 = vpop.f32.mrb[0].mxu0
      %v751 = vpop.f32.mrb[0].mxu0
      %v752 = vadd.f32 0.0, %v751
      %v753 = vpop.f32.mrb[0].mxu0
      %754 = vmatprep.mubr.bf16.mxu0 0
      %755 = vmatmul.mubr.bf16.gmra.mrb[0].mxu0 %v695
      %v756 = vpop.f32.mrb[0].mxu0
      %v757 = vadd.f32 0.0, %v756
      %v758 = vpop.f32.mrb[0].mxu0
      %v759 = vpop.f32.mrb[0].mxu0
      %v760 = vadd.f32 0.0, %v759
      %v761 = vpop.f32.mrb[0].mxu0
      %762 = vmatprep.mubr.bf16.mxu0 0
      %763 = vmatmul.mubr.bf16.gmra.mrb[0].mxu0 %v698
      %v764 = vpop.f32.mrb[0].mxu0
      %v765 = vadd.f32 0.0, %v764
      %v766 = vpop.f32.mrb[0].mxu0
      %v767 = vpop.f32.mrb[0].mxu0
      %v768 = vadd.f32 0.0, %v767
      %v769 = vpop.f32.mrb[0].mxu0
      %770 = vmatprep.mubr.bf16.mxu0 0
      %771 = vmatmul.mubr.bf16.gmra.mrb[0].mxu0 %v701
      %v772 = vpop.f32.mrb[0].mxu0
      %v773 = vadd.f32 0.0, %v772
      %v774 = vpop.f32.mrb[0].mxu0
      %v775 = vpop.f32.mrb[0].mxu0
      %v776 = vpop.f32.mrb[0].mxu0
      %777 = vdwg.mxu0
      %v778 = vadd.f32 %v644, %v741
      %v779 = vadd.f32 %v645, %v744
      %v780 = vadd.f32 %v646, %v749
      %v781 = vadd.f32 %v647, %v752
      %v782 = vadd.f32 %v648, %v757
      %v783 = vadd.f32 %v649, %v760
      %v784 = vadd.f32 %v650, %v765
      %v785 = vadd.f32 %v651, %v768
      %v786 = vadd.f32 %v652, %v773
      %s787 = scalar_lea.vmem %s209, 132
      %v788 = vld [vmem:[%s787] sm:$0xf]
      %v789 = vld [vmem:[%s787 + $0x4] sm:$0xf]
      %v790 = vld [vmem:[%s787 + $0x8] sm:$0xf]
      %v791 = vld [vmem:[%s787 + $0xc] sm:$0xf]
      %v792 = vld [vmem:[%s787 + $0x10] sm:$0xf]
      %v793 = vld [vmem:[%s787 + $0x14] sm:$0xf]
      %v794 = vld [vmem:[%s787 + $0x18] sm:$0xf]
      %v795 = vld [vmem:[%s787 + $0x1c] sm:$0xf]
      %v796 = vld [vmem:[%s787 + $0x20] sm:$0xf]
      %s797 = scalar_lea.vmem %s1, 8
      %v798 = vld [vmem:[%s797] sm:$0x3]
      %v808 = vunpack.c.l.b16 %v788
      %v809 = vunpack.c.l.b16 %v789
      %v810 = vunpack.c.l.b16 %v790
      %v811 = vunpack.c.l.b16 %v791
      %v812 = vunpack.c.l.b16 %v792
      %v813 = vunpack.c.l.b16 %v793
      %v814 = vunpack.c.l.b16 %v794
      %v815 = vunpack.c.l.b16 %v795
      %v816 = vunpack.c.l.b16 %v796
      %v817 = vpack.c.b16 %v809, %v808
      %v818 = vpack.c.b16 %v811, %v810
      %v819 = vpack.c.b16 %v813, %v812
      %v820 = vpack.c.b16 %v815, %v814
      %v821 = vpack.c.b16 %v816, %v816
      %v823 = vsel %vm272, %v817, 0
      %v826 = vsel %vm272, %v818, 0
      %v829 = vsel %vm272, %v819, 0
      %v832 = vsel %vm272, %v820, 0
      %v835 = vsel %vm272, %v821, 0
      %v838 = vsel %vm288, %v798, 0
      %840 = vmatprep.subr.bf16.mxu0 0
      %841 = vmatpush1.bf16.msra.mxu0 %v838
      %842 = vmatprep.subr.bf16.mxu0 0
      %843 = vmatpush1.bf16.msra.mxu0 0
      %844 = vmatprep.subr.bf16.mxu0 0
      %845 = vmatpush1.bf16.msra.mxu0 0
      %846 = vmatprep.subr.bf16.mxu0 0
      %847 = vmatpush1.bf16.msra.mxu0 0
      %848 = vmatprep.subr.bf16.mxu0 0
      %849 = vmatpush1.bf16.msra.mxu0 0
      %850 = vmatprep.subr.bf16.mxu0 0
      %851 = vmatpush1.bf16.msra.mxu0 0
      %852 = vmatprep.subr.bf16.mxu0 0
      %853 = vmatpush1.bf16.msra.mxu0 0
      %854 = vmatprep.subr.bf16.mxu0 0
      %855 = vmatpush1.bf16.msra.mxu0 0
      %856 = vmatprep.subr.bf16.mxu0 0
      %857 = vmatpush1.bf16.msra.mxu0 0
      %858 = vmatprep.subr.bf16.mxu0 0
      %859 = vmatpush1.bf16.msra.mxu0 0
      %860 = vmatprep.subr.bf16.mxu0 0
      %861 = vmatpush1.bf16.msra.mxu0 0
      %862 = vmatprep.subr.bf16.mxu0 0
      %863 = vmatpush1.bf16.msra.mxu0 0
      %864 = vmatprep.subr.bf16.mxu0 0
      %865 = vmatpush1.bf16.msra.mxu0 0
      %866 = vmatprep.subr.bf16.mxu0 0
      %867 = vmatpush1.bf16.msra.mxu0 0
      %868 = vmatprep.subr.bf16.mxu0 0
      %869 = vmatpush1.bf16.msra.mxu0 0
      %870 = vmatprep.subr.bf16.mxu0 0
      %871 = vmatpush1.bf16.msra.mxu0 0
      %872 = vmatprep.mubr.bf16.mxu0 0
      %873 = vmatmul.mubr.bf16.gmra.mrb[0].mxu0 %v823
      %v874 = vpop.f32.mrb[0].mxu0
      %v875 = vadd.f32 0.0, %v874
      %v876 = vpop.f32.mrb[0].mxu0
      %v877 = vpop.f32.mrb[0].mxu0
      %v878 = vadd.f32 0.0, %v877
      %v879 = vpop.f32.mrb[0].mxu0
      %880 = vmatprep.mubr.bf16.mxu0 0
      %881 = vmatmul.mubr.bf16.gmra.mrb[0].mxu0 %v826
      %v882 = vpop.f32.mrb[0].mxu0
      %v883 = vadd.f32 0.0, %v882
      %v884 = vpop.f32.mrb[0].mxu0
      %v885 = vpop.f32.mrb[0].mxu0
      %v886 = vadd.f32 0.0, %v885
      %v887 = vpop.f32.mrb[0].mxu0
      %888 = vmatprep.mubr.bf16.mxu0 0
      %889 = vmatmul.mubr.bf16.gmra.mrb[0].mxu0 %v829
      %v890 = vpop.f32.mrb[0].mxu0
      %v891 = vadd.f32 0.0, %v890
      %v892 = vpop.f32.mrb[0].mxu0
      %v893 = vpop.f32.mrb[0].mxu0
      %v894 = vadd.f32 0.0, %v893
      %v895 = vpop.f32.mrb[0].mxu0
      %896 = vmatprep.mubr.bf16.mxu0 0
      %897 = vmatmul.mubr.bf16.gmra.mrb[0].mxu0 %v832
      %v898 = vpop.f32.mrb[0].mxu0
      %v899 = vadd.f32 0.0, %v898
      %v900 = vpop.f32.mrb[0].mxu0
      %v901 = vpop.f32.mrb[0].mxu0
      %v902 = vadd.f32 0.0, %v901
      %v903 = vpop.f32.mrb[0].mxu0
      %904 = vmatprep.mubr.bf16.mxu0 0
      %905 = vmatmul.mubr.bf16.gmra.mrb[0].mxu0 %v835
      %v906 = vpop.f32.mrb[0].mxu0
      %v907 = vadd.f32 0.0, %v906
      %v908 = vpop.f32.mrb[0].mxu0
      %v909 = vpop.f32.mrb[0].mxu0
      %v910 = vpop.f32.mrb[0].mxu0
      %911 = vdwg.mxu0
      %v912 = vadd.f32 %v778, %v875
      %v913 = vadd.f32 %v779, %v878
      %v914 = vadd.f32 %v780, %v883
      %v915 = vadd.f32 %v781, %v886
      %v916 = vadd.f32 %v782, %v891
      %v917 = vadd.f32 %v783, %v894
      %v918 = vadd.f32 %v784, %v899
      %v919 = vadd.f32 %v785, %v902
      %v920 = vadd.f32 %v786, %v907
      %v921 = vld [vmem:[%s653] sm:$0xf]
      %v922 = vld [vmem:[%s653 + $0x4] sm:$0xf]
      %v923 = vld [vmem:[%s653 + $0x8] sm:$0xf]
      %v924 = vld [vmem:[%s653 + $0xc] sm:$0xf]
      %v925 = vld [vmem:[%s653 + $0x10] sm:$0xf]
      %v926 = vld [vmem:[%s653 + $0x14] sm:$0xf]
      %v927 = vld [vmem:[%s653 + $0x18] sm:$0xf]
      %v928 = vld [vmem:[%s653 + $0x1c] sm:$0xf]
      %v929 = vld [vmem:[%s653 + $0x20] sm:$0xf]
      %v930 = vld [vmem:[%s653 + $0x24] sm:$0x1]
      %s931 = scalar_lea.vmem %s1, 10
      %v932 = vld [vmem:[%s931] sm:$0x3]
      %v943 = vunpack.c.l.b16 %v921
      %v944 = vunpack.c.l.b16 %v922
      %v945 = vunpack.c.l.b16 %v923
      %v946 = vunpack.c.l.b16 %v924
      %v947 = vunpack.c.l.b16 %v925
      %v948 = vunpack.c.l.b16 %v926
      %v949 = vunpack.c.l.b16 %v927
      %v950 = vunpack.c.l.b16 %v928
      %v951 = vunpack.c.l.b16 %v929
      %v952 = vunpack.c.l.b16 %v930
      %v953 = vpack.c.b16 %v944, %v943
      %v954 = vpack.c.b16 %v946, %v945
      %v955 = vpack.c.b16 %v948, %v947
      %v956 = vpack.c.b16 %v950, %v949
      %v957 = vpack.c.b16 %v952, %v951
      %v959 = vshrl.u32 %v953, 16
      %v961 = vshll.u32 %v953, 16
      %v963 = vrot.slane %v961, 1
      %v964 = vor.u32 %v959, %v963
      %v966 = vshll.u32 %v954, 16
      %v968 = vrot.slane %v966, 1
      %v969 = vsel %vm514, %v964, %v968
      %v970 = vshrl.u32 %v954, 16
      %v972 = vor.u32 %v970, %v968
      %v974 = vshll.u32 %v955, 16
      %v976 = vrot.slane %v974, 1
      %v977 = vsel %vm514, %v972, %v976
      %v978 = vshrl.u32 %v955, 16
      %v980 = vor.u32 %v978, %v976
      %v982 = vshll.u32 %v956, 16
      %v984 = vrot.slane %v982, 1
      %v985 = vsel %vm514, %v980, %v984
      %v986 = vshrl.u32 %v956, 16
      %v988 = vor.u32 %v986, %v984
      %v990 = vshll.u32 %v957, 16
      %v992 = vrot.slane %v990, 1
      %v993 = vsel %vm514, %v988, %v992
      %v994 = vshrl.u32 %v957, 16
      %v996 = vor.u32 %v994, %v992
      %v998 = vsel %vm272, %v969, 0
      %v1001 = vsel %vm272, %v977, 0
      %v1004 = vsel %vm272, %v985, 0
      %v1007 = vsel %vm272, %v993, 0
      %v1010 = vsel %vm272, %v996, 0
      %v1013 = vsel %vm288, %v932, 0
      %1015 = vmatprep.subr.bf16.mxu0 0
      %1016 = vmatpush1.bf16.msra.mxu0 %v1013
      %1017 = vmatprep.subr.bf16.mxu0 0
      %1018 = vmatpush1.bf16.msra.mxu0 0
      %1019 = vmatprep.subr.bf16.mxu0 0
      %1020 = vmatpush1.bf16.msra.mxu0 0
      %1021 = vmatprep.subr.bf16.mxu0 0
      %1022 = vmatpush1.bf16.msra.mxu0 0
      %1023 = vmatprep.subr.bf16.mxu0 0
      %1024 = vmatpush1.bf16.msra.mxu0 0
      %1025 = vmatprep.subr.bf16.mxu0 0
      %1026 = vmatpush1.bf16.msra.mxu0 0
      %1027 = vmatprep.subr.bf16.mxu0 0
      %1028 = vmatpush1.bf16.msra.mxu0 0
      %1029 = vmatprep.subr.bf16.mxu0 0
      %1030 = vmatpush1.bf16.msra.mxu0 0
      %1031 = vmatprep.subr.bf16.mxu0 0
      %1032 = vmatpush1.bf16.msra.mxu0 0
      %1033 = vmatprep.subr.bf16.mxu0 0
      %1034 = vmatpush1.bf16.msra.mxu0 0
      %1035 = vmatprep.subr.bf16.mxu0 0
      %1036 = vmatpush1.bf16.msra.mxu0 0
      %1037 = vmatprep.subr.bf16.mxu0 0
      %1038 = vmatpush1.bf16.msra.mxu0 0
      %1039 = vmatprep.subr.bf16.mxu0 0
      %1040 = vmatpush1.bf16.msra.mxu0 0
      %1041 = vmatprep.subr.bf16.mxu0 0
      %1042 = vmatpush1.bf16.msra.mxu0 0
      %1043 = vmatprep.subr.bf16.mxu0 0
      %1044 = vmatpush1.bf16.msra.mxu0 0
      %1045 = vmatprep.subr.bf16.mxu0 0
      %1046 = vmatpush1.bf16.msra.mxu0 0
      %1047 = vmatprep.mubr.bf16.mxu0 0
      %1048 = vmatmul.mubr.bf16.gmra.mrb[0].mxu0 %v998
      %v1049 = vpop.f32.mrb[0].mxu0
      %v1050 = vadd.f32 0.0, %v1049
      %v1051 = vpop.f32.mrb[0].mxu0
      %v1052 = vpop.f32.mrb[0].mxu0
      %v1053 = vadd.f32 0.0, %v1052
      %v1054 = vpop.f32.mrb[0].mxu0
      %1055 = vmatprep.mubr.bf16.mxu0 0
      %1056 = vmatmul.mubr.bf16.gmra.mrb[0].mxu0 %v1001
      %v1057 = vpop.f32.mrb[0].mxu0
      %v1058 = vadd.f32 0.0, %v1057
      %v1059 = vpop.f32.mrb[0].mxu0
      %v1060 = vpop.f32.mrb[0].mxu0
      %v1061 = vadd.f32 0.0, %v1060
      %v1062 = vpop.f32.mrb[0].mxu0
      %1063 = vmatprep.mubr.bf16.mxu0 0
      %1064 = vmatmul.mubr.bf16.gmra.mrb[0].mxu0 %v1004
      %v1065 = vpop.f32.mrb[0].mxu0
      %v1066 = vadd.f32 0.0, %v1065
      %v1067 = vpop.f32.mrb[0].mxu0
      %v1068 = vpop.f32.mrb[0].mxu0
      %v1069 = vadd.f32 0.0, %v1068
      %v1070 = vpop.f32.mrb[0].mxu0
      %1071 = vmatprep.mubr.bf16.mxu0 0
      %1072 = vmatmul.mubr.bf16.gmra.mrb[0].mxu0 %v1007
      %v1073 = vpop.f32.mrb[0].mxu0
      %v1074 = vadd.f32 0.0, %v1073
      %v1075 = vpop.f32.mrb[0].mxu0
      %v1076 = vpop.f32.mrb[0].mxu0
      %v1077 = vadd.f32 0.0, %v1076
      %v1078 = vpop.f32.mrb[0].mxu0
      %1079 = vmatprep.mubr.bf16.mxu0 0
      %1080 = vmatmul.mubr.bf16.gmra.mrb[0].mxu0 %v1010
      %v1081 = vpop.f32.mrb[0].mxu0
      %v1082 = vadd.f32 0.0, %v1081
      %v1083 = vpop.f32.mrb[0].mxu0
      %v1084 = vpop.f32.mrb[0].mxu0
      %v1085 = vpop.f32.mrb[0].mxu0
      %1086 = vdwg.mxu0
      %v1087 = vadd.f32 %v912, %v1050
      %v1088 = vadd.f32 %v913, %v1053
      %v1089 = vadd.f32 %v914, %v1058
      %v1090 = vadd.f32 %v915, %v1061
      %v1091 = vadd.f32 %v916, %v1066
      %v1092 = vadd.f32 %v917, %v1069
      %v1093 = vadd.f32 %v918, %v1074
      %v1094 = vadd.f32 %v919, %v1077
      %v1095 = vadd.f32 %v920, %v1082
      %v1096 = vld [vmem:[%s209 + $0x4] sm:$0xf]
      %v1097 = vld [vmem:[%s209 + $0x8] sm:$0xf]
      %v1098 = vld [vmem:[%s209 + $0xc] sm:$0xf]
      %v1099 = vld [vmem:[%s209 + $0x10] sm:$0xf]
      %v1100 = vld [vmem:[%s209 + $0x14] sm:$0xf]
      %v1101 = vld [vmem:[%s209 + $0x18] sm:$0xf]
      %v1102 = vld [vmem:[%s209 + $0x1c] sm:$0xf]
      %v1103 = vld [vmem:[%s209 + $0x20] sm:$0xf]
      %v1104 = vld [vmem:[%s209 + $0x24] sm:$0xf]
      %v1105 = vld [vmem:[%s209 + $0x28] sm:$0x1]
      %s1106 = scalar_lea.vmem %s1, 12
      %v1107 = vld [vmem:[%s1106] sm:$0x3]
      %v1118 = vunpack.c.l.b16 %v1096
      %v1119 = vunpack.c.l.b16 %v1097
      %v1120 = vunpack.c.l.b16 %v1098
      %v1121 = vunpack.c.l.b16 %v1099
      %v1122 = vunpack.c.l.b16 %v1100
      %v1123 = vunpack.c.l.b16 %v1101
      %v1124 = vunpack.c.l.b16 %v1102
      %v1125 = vunpack.c.l.b16 %v1103
      %v1126 = vunpack.c.l.b16 %v1104
      %v1127 = vunpack.c.l.b16 %v1105
      %v1128 = vpack.c.b16 %v1119, %v1118
      %v1129 = vpack.c.b16 %v1121, %v1120
      %v1130 = vpack.c.b16 %v1123, %v1122
      %v1131 = vpack.c.b16 %v1125, %v1124
      %v1132 = vpack.c.b16 %v1127, %v1126
      %v1134 = vshrl.u32 %v1128, 16
      %v1136 = vshll.u32 %v1128, 16
      %v1138 = vrot.slane %v1136, 1
      %v1139 = vor.u32 %v1134, %v1138
      %v1141 = vshll.u32 %v1129, 16
      %v1143 = vrot.slane %v1141, 1
      %v1144 = vsel %vm514, %v1139, %v1143
      %v1145 = vshrl.u32 %v1129, 16
      %v1147 = vor.u32 %v1145, %v1143
      %v1149 = vshll.u32 %v1130, 16
      %v1151 = vrot.slane %v1149, 1
      %v1152 = vsel %vm514, %v1147, %v1151
      %v1153 = vshrl.u32 %v1130, 16
      %v1155 = vor.u32 %v1153, %v1151
      %v1157 = vshll.u32 %v1131, 16
      %v1159 = vrot.slane %v1157, 1
      %v1160 = vsel %vm514, %v1155, %v1159
      %v1161 = vshrl.u32 %v1131, 16
      %v1163 = vor.u32 %v1161, %v1159
      %v1165 = vshll.u32 %v1132, 16
      %v1167 = vrot.slane %v1165, 1
      %v1168 = vsel %vm514, %v1163, %v1167
      %v1169 = vshrl.u32 %v1132, 16
      %v1171 = vor.u32 %v1169, %v1167
      %v1173 = vsel %vm272, %v1144, 0
      %v1176 = vsel %vm272, %v1152, 0
      %v1179 = vsel %vm272, %v1160, 0
      %v1182 = vsel %vm272, %v1168, 0
      %v1185 = vsel %vm272, %v1171, 0
      %v1188 = vsel %vm288, %v1107, 0
      %1190 = vmatprep.subr.bf16.mxu0 0
      %1191 = vmatpush1.bf16.msra.mxu0 %v1188
      %1192 = vmatprep.subr.bf16.mxu0 0
      %1193 = vmatpush1.bf16.msra.mxu0 0
      %1194 = vmatprep.subr.bf16.mxu0 0
      %1195 = vmatpush1.bf16.msra.mxu0 0
      %1196 = vmatprep.subr.bf16.mxu0 0
      %1197 = vmatpush1.bf16.msra.mxu0 0
      %1198 = vmatprep.subr.bf16.mxu0 0
      %1199 = vmatpush1.bf16.msra.mxu0 0
      %1200 = vmatprep.subr.bf16.mxu0 0
      %1201 = vmatpush1.bf16.msra.mxu0 0
      %1202 = vmatprep.subr.bf16.mxu0 0
      %1203 = vmatpush1.bf16.msra.mxu0 0
      %1204 = vmatprep.subr.bf16.mxu0 0
      %1205 = vmatpush1.bf16.msra.mxu0 0
      %1206 = vmatprep.subr.bf16.mxu0 0
      %1207 = vmatpush1.bf16.msra.mxu0 0
      %1208 = vmatprep.subr.bf16.mxu0 0
      %1209 = vmatpush1.bf16.msra.mxu0 0
      %1210 = vmatprep.subr.bf16.mxu0 0
      %1211 = vmatpush1.bf16.msra.mxu0 0
      %1212 = vmatprep.subr.bf16.mxu0 0
      %1213 = vmatpush1.bf16.msra.mxu0 0
      %1214 = vmatprep.subr.bf16.mxu0 0
      %1215 = vmatpush1.bf16.msra.mxu0 0
      %1216 = vmatprep.subr.bf16.mxu0 0
      %1217 = vmatpush1.bf16.msra.mxu0 0
      %1218 = vmatprep.subr.bf16.mxu0 0
      %1219 = vmatpush1.bf16.msra.mxu0 0
      %1220 = vmatprep.subr.bf16.mxu0 0
      %1221 = vmatpush1.bf16.msra.mxu0 0
      %1222 = vmatprep.mubr.bf16.mxu0 0
      %1223 = vmatmul.mubr.bf16.gmra.mrb[0].mxu0 %v1173
      %v1224 = vpop.f32.mrb[0].mxu0
      %v1225 = vadd.f32 0.0, %v1224
      %v1226 = vpop.f32.mrb[0].mxu0
      %v1227 = vpop.f32.mrb[0].mxu0
      %v1228 = vadd.f32 0.0, %v1227
      %v1229 = vpop.f32.mrb[0].mxu0
      %1230 = vmatprep.mubr.bf16.mxu0 0
      %1231 = vmatmul.mubr.bf16.gmra.mrb[0].mxu0 %v1176
      %v1232 = vpop.f32.mrb[0].mxu0
      %v1233 = vadd.f32 0.0, %v1232
      %v1234 = vpop.f32.mrb[0].mxu0
      %v1235 = vpop.f32.mrb[0].mxu0
      %v1236 = vadd.f32 0.0, %v1235
      %v1237 = vpop.f32.mrb[0].mxu0
      %1238 = vmatprep.mubr.bf16.mxu0 0
      %1239 = vmatmul.mubr.bf16.gmra.mrb[0].mxu0 %v1179
      %v1240 = vpop.f32.mrb[0].mxu0
      %v1241 = vadd.f32 0.0, %v1240
      %v1242 = vpop.f32.mrb[0].mxu0
      %v1243 = vpop.f32.mrb[0].mxu0
      %v1244 = vadd.f32 0.0, %v1243
      %v1245 = vpop.f32.mrb[0].mxu0
      %1246 = vmatprep.mubr.bf16.mxu0 0
      %1247 = vmatmul.mubr.bf16.gmra.mrb[0].mxu0 %v1182
      %v1248 = vpop.f32.mrb[0].mxu0
      %v1249 = vadd.f32 0.0, %v1248
      %v1250 = vpop.f32.mrb[0].mxu0
      %v1251 = vpop.f32.mrb[0].mxu0
      %v1252 = vadd.f32 0.0, %v1251
      %v1253 = vpop.f32.mrb[0].mxu0
      %1254 = vmatprep.mubr.bf16.mxu0 0
      %1255 = vmatmul.mubr.bf16.gmra.mrb[0].mxu0 %v1185
      %v1256 = vpop.f32.mrb[0].mxu0
      %v1257 = vadd.f32 0.0, %v1256
      %v1258 = vpop.f32.mrb[0].mxu0
      %v1259 = vpop.f32.mrb[0].mxu0
      %v1260 = vpop.f32.mrb[0].mxu0
      %1261 = vdwg.mxu0
      %v1262 = vadd.f32 %v1087, %v1225
      %v1263 = vadd.f32 %v1088, %v1228
      %v1264 = vadd.f32 %v1089, %v1233
      %v1265 = vadd.f32 %v1090, %v1236
      %v1266 = vadd.f32 %v1091, %v1241
      %v1267 = vadd.f32 %v1092, %v1244
      %v1268 = vadd.f32 %v1093, %v1249
      %v1269 = vadd.f32 %v1094, %v1252
      %v1270 = vadd.f32 %v1095, %v1257
      %v1271 = vld [vmem:[%s237 + $0x4] sm:$0xf]
      %v1272 = vld [vmem:[%s237 + $0x8] sm:$0xf]
      %v1273 = vld [vmem:[%s237 + $0xc] sm:$0xf]
      %v1274 = vld [vmem:[%s237 + $0x10] sm:$0xf]
      %v1275 = vld [vmem:[%s237 + $0x14] sm:$0xf]
      %v1276 = vld [vmem:[%s237 + $0x18] sm:$0xf]
      %v1277 = vld [vmem:[%s237 + $0x1c] sm:$0xf]
      %v1278 = vld [vmem:[%s237 + $0x20] sm:$0xf]
      %v1279 = vld [vmem:[%s237 + $0x24] sm:$0xf]
      %v1280 = vld [vmem:[%s237 + $0x28] sm:$0x1]
      %s1281 = scalar_lea.vmem %s1, 14
      %v1282 = vld [vmem:[%s1281] sm:$0x3]
      %v1293 = vunpack.c.l.b16 %v1271
      %v1294 = vunpack.c.l.b16 %v1272
      %v1295 = vunpack.c.l.b16 %v1273
      %v1296 = vunpack.c.l.b16 %v1274
      %v1297 = vunpack.c.l.b16 %v1275
      %v1298 = vunpack.c.l.b16 %v1276
      %v1299 = vunpack.c.l.b16 %v1277
      %v1300 = vunpack.c.l.b16 %v1278
      %v1301 = vunpack.c.l.b16 %v1279
      %v1302 = vunpack.c.l.b16 %v1280
      %v1303 = vpack.c.b16 %v1294, %v1293
      %v1304 = vpack.c.b16 %v1296, %v1295
      %v1305 = vpack.c.b16 %v1298, %v1297
      %v1306 = vpack.c.b16 %v1300, %v1299
      %v1307 = vpack.c.b16 %v1302, %v1301
      %v1309 = vshrl.u32 %v1303, 16
      %v1311 = vshll.u32 %v1303, 16
      %v1313 = vrot.slane %v1311, 1
      %v1314 = vor.u32 %v1309, %v1313
      %v1316 = vshll.u32 %v1304, 16
      %v1318 = vrot.slane %v1316, 1
      %v1319 = vsel %vm514, %v1314, %v1318
      %v1320 = vshrl.u32 %v1304, 16
      %v1322 = vor.u32 %v1320, %v1318
      %v1324 = vshll.u32 %v1305, 16
      %v1326 = vrot.slane %v1324, 1
      %v1327 = vsel %vm514, %v1322, %v1326
      %v1328 = vshrl.u32 %v1305, 16
      %v1330 = vor.u32 %v1328, %v1326
      %v1332 = vshll.u32 %v1306, 16
      %v1334 = vrot.slane %v1332, 1
      %v1335 = vsel %vm514, %v1330, %v1334
      %v1336 = vshrl.u32 %v1306, 16
      %v1338 = vor.u32 %v1336, %v1334
      %v1340 = vshll.u32 %v1307, 16
      %v1342 = vrot.slane %v1340, 1
      %v1343 = vsel %vm514, %v1338, %v1342
      %v1344 = vshrl.u32 %v1307, 16
      %v1346 = vor.u32 %v1344, %v1342
      %v1348 = vsel %vm272, %v1319, 0
      %v1351 = vsel %vm272, %v1327, 0
      %v1354 = vsel %vm272, %v1335, 0
      %v1357 = vsel %vm272, %v1343, 0
      %v1360 = vsel %vm272, %v1346, 0
      %v1363 = vsel %vm288, %v1282, 0
      %1365 = vmatprep.subr.bf16.mxu0 0
      %1366 = vmatpush1.bf16.msra.mxu0 %v1363
      %1367 = vmatprep.subr.bf16.mxu0 0
      %1368 = vmatpush1.bf16.msra.mxu0 0
      %1369 = vmatprep.subr.bf16.mxu0 0
      %1370 = vmatpush1.bf16.msra.mxu0 0
      %1371 = vmatprep.subr.bf16.mxu0 0
      %1372 = vmatpush1.bf16.msra.mxu0 0
      %1373 = vmatprep.subr.bf16.mxu0 0
      %1374 = vmatpush1.bf16.msra.mxu0 0
      %1375 = vmatprep.subr.bf16.mxu0 0
      %1376 = vmatpush1.bf16.msra.mxu0 0
      %1377 = vmatprep.subr.bf16.mxu0 0
      %1378 = vmatpush1.bf16.msra.mxu0 0
      %1379 = vmatprep.subr.bf16.mxu0 0
      %1380 = vmatpush1.bf16.msra.mxu0 0
      %1381 = vmatprep.subr.bf16.mxu0 0
      %1382 = vmatpush1.bf16.msra.mxu0 0
      %1383 = vmatprep.subr.bf16.mxu0 0
      %1384 = vmatpush1.bf16.msra.mxu0 0
      %1385 = vmatprep.subr.bf16.mxu0 0
      %1386 = vmatpush1.bf16.msra.mxu0 0
      %1387 = vmatprep.subr.bf16.mxu0 0
      %1388 = vmatpush1.bf16.msra.mxu0 0
      %1389 = vmatprep.subr.bf16.mxu0 0
      %1390 = vmatpush1.bf16.msra.mxu0 0
      %1391 = vmatprep.subr.bf16.mxu0 0
      %1392 = vmatpush1.bf16.msra.mxu0 0
      %1393 = vmatprep.subr.bf16.mxu0 0
      %1394 = vmatpush1.bf16.msra.mxu0 0
      %1395 = vmatprep.subr.bf16.mxu0 0
      %1396 = vmatpush1.bf16.msra.mxu0 0
      %1397 = vmatprep.mubr.bf16.mxu0 0
      %1398 = vmatmul.mubr.bf16.gmra.mrb[0].mxu0 %v1348
      %v1399 = vpop.f32.mrb[0].mxu0
      %v1400 = vadd.f32 0.0, %v1399
      %v1401 = vpop.f32.mrb[0].mxu0
      %v1402 = vpop.f32.mrb[0].mxu0
      %v1403 = vadd.f32 0.0, %v1402
      %v1404 = vpop.f32.mrb[0].mxu0
      %1405 = vmatprep.mubr.bf16.mxu0 0
      %1406 = vmatmul.mubr.bf16.gmra.mrb[0].mxu0 %v1351
      %v1407 = vpop.f32.mrb[0].mxu0
      %v1408 = vadd.f32 0.0, %v1407
      %v1409 = vpop.f32.mrb[0].mxu0
      %v1410 = vpop.f32.mrb[0].mxu0
      %v1411 = vadd.f32 0.0, %v1410
      %v1412 = vpop.f32.mrb[0].mxu0
      %1413 = vmatprep.mubr.bf16.mxu0 0
      %1414 = vmatmul.mubr.bf16.gmra.mrb[0].mxu0 %v1354
      %v1415 = vpop.f32.mrb[0].mxu0
      %v1416 = vadd.f32 0.0, %v1415
      %v1417 = vpop.f32.mrb[0].mxu0
      %v1418 = vpop.f32.mrb[0].mxu0
      %v1419 = vadd.f32 0.0, %v1418
      %v1420 = vpop.f32.mrb[0].mxu0
      %1421 = vmatprep.mubr.bf16.mxu0 0
      %1422 = vmatmul.mubr.bf16.gmra.mrb[0].mxu0 %v1357
      %v1423 = vpop.f32.mrb[0].mxu0
      %v1424 = vadd.f32 0.0, %v1423
      %v1425 = vpop.f32.mrb[0].mxu0
      %v1426 = vpop.f32.mrb[0].mxu0
      %v1427 = vadd.f32 0.0, %v1426
      %v1428 = vpop.f32.mrb[0].mxu0
      %1429 = vmatprep.mubr.bf16.mxu0 0
      %1430 = vmatmul.mubr.bf16.gmra.mrb[0].mxu0 %v1360
      %v1431 = vpop.f32.mrb[0].mxu0
      %v1432 = vadd.f32 0.0, %v1431
      %v1433 = vpop.f32.mrb[0].mxu0
      %v1434 = vpop.f32.mrb[0].mxu0
      %v1435 = vpop.f32.mrb[0].mxu0
      %1436 = vdwg.mxu0
      %v1437 = vadd.f32 %v1262, %v1400
      %v1438 = vadd.f32 %v1263, %v1403
      %v1439 = vadd.f32 %v1264, %v1408
      %v1440 = vadd.f32 %v1265, %v1411
      %v1441 = vadd.f32 %v1266, %v1416
      %v1442 = vadd.f32 %v1267, %v1419
      %v1443 = vadd.f32 %v1268, %v1424
      %v1444 = vadd.f32 %v1269, %v1427
      %v1445 = vadd.f32 %v1270, %v1432
      %v1446 = vld [vmem:[%s209 + $0x4] sm:$0xe]
      %s1447 = scalar_lea.vmem %s1, 16
      %v1448 = vld [vmem:[%s1447] sm:$0x3]
      %v1450 = vunpack.c.l.b16 %v1446
      %v1451 = vpack.c.b16 %v1119, %v1450
      %vm1452 = vcmask 1046528
      %v1453 = vrot.slane %v1451, 1
      %v1454 = vrot.slane %v1129, 1
      %v1455 = vsel %vm1452, %v1453, %v1454
      %v1456 = vrot.slane %v1130, 1
      %v1457 = vsel %vm1452, %v1454, %v1456
      %v1458 = vrot.slane %v1131, 1
      %v1459 = vsel %vm1452, %v1456, %v1458
      %v1460 = vrot.slane %v1132, 1
      %v1461 = vsel %vm1452, %v1458, %v1460
      %v1463 = vsel %vm272, %v1455, 0
      %v1466 = vsel %vm272, %v1457, 0
      %v1469 = vsel %vm272, %v1459, 0
      %v1472 = vsel %vm272, %v1461, 0
      %v1475 = vsel %vm272, %v1460, 0
      %v1478 = vsel %vm288, %v1448, 0
      %1480 = vmatprep.subr.bf16.mxu0 0
      %1481 = vmatpush1.bf16.msra.mxu0 %v1478
      %1482 = vmatprep.subr.bf16.mxu0 0
      %1483 = vmatpush1.bf16.msra.mxu0 0
      %1484 = vmatprep.subr.bf16.mxu0 0
      %1485 = vmatpush1.bf16.msra.mxu0 0
      %1486 = vmatprep.subr.bf16.mxu0 0
      %1487 = vmatpush1.bf16.msra.mxu0 0
      %1488 = vmatprep.subr.bf16.mxu0 0
      %1489 = vmatpush1.bf16.msra.mxu0 0
      %1490 = vmatprep.subr.bf16.mxu0 0
      %1491 = vmatpush1.bf16.msra.mxu0 0
      %1492 = vmatprep.subr.bf16.mxu0 0
      %1493 = vmatpush1.bf16.msra.mxu0 0
      %1494 = vmatprep.subr.bf16.mxu0 0
      %1495 = vmatpush1.bf16.msra.mxu0 0
      %1496 = vmatprep.subr.bf16.mxu0 0
      %1497 = vmatpush1.bf16.msra.mxu0 0
      %1498 = vmatprep.subr.bf16.mxu0 0
      %1499 = vmatpush1.bf16.msra.mxu0 0
      %1500 = vmatprep.subr.bf16.mxu0 0
      %1501 = vmatpush1.bf16.msra.mxu0 0
      %1502 = vmatprep.subr.bf16.mxu0 0
      %1503 = vmatpush1.bf16.msra.mxu0 0
      %1504 = vmatprep.subr.bf16.mxu0 0
      %1505 = vmatpush1.bf16.msra.mxu0 0
      %1506 = vmatprep.subr.bf16.mxu0 0
      %1507 = vmatpush1.bf16.msra.mxu0 0
      %1508 = vmatprep.subr.bf16.mxu0 0
      %1509 = vmatpush1.bf16.msra.mxu0 0
      %1510 = vmatprep.subr.bf16.mxu0 0
      %1511 = vmatpush1.bf16.msra.mxu0 0
      %1512 = vmatprep.mubr.bf16.mxu0 0
      %1513 = vmatmul.mubr.bf16.gmra.mrb[0].mxu0 %v1463
      %v1514 = vpop.f32.mrb[0].mxu0
      %v1515 = vadd.f32 0.0, %v1514
      %v1516 = vpop.f32.mrb[0].mxu0
      %v1517 = vpop.f32.mrb[0].mxu0
      %v1518 = vadd.f32 0.0, %v1517
      %v1519 = vpop.f32.mrb[0].mxu0
      %1520 = vmatprep.mubr.bf16.mxu0 0
      %1521 = vmatmul.mubr.bf16.gmra.mrb[0].mxu0 %v1466
      %v1522 = vpop.f32.mrb[0].mxu0
      %v1523 = vadd.f32 0.0, %v1522
      %v1524 = vpop.f32.mrb[0].mxu0
      %v1525 = vpop.f32.mrb[0].mxu0
      %v1526 = vadd.f32 0.0, %v1525
      %v1527 = vpop.f32.mrb[0].mxu0
      %1528 = vmatprep.mubr.bf16.mxu0 0
      %1529 = vmatmul.mubr.bf16.gmra.mrb[0].mxu0 %v1469
      %v1530 = vpop.f32.mrb[0].mxu0
      %v1531 = vadd.f32 0.0, %v1530
      %v1532 = vpop.f32.mrb[0].mxu0
      %v1533 = vpop.f32.mrb[0].mxu0
      %v1534 = vadd.f32 0.0, %v1533
      %v1535 = vpop.f32.mrb[0].mxu0
      %1536 = vmatprep.mubr.bf16.mxu0 0
      %1537 = vmatmul.mubr.bf16.gmra.mrb[0].mxu0 %v1472
      %v1538 = vpop.f32.mrb[0].mxu0
      %v1539 = vadd.f32 0.0, %v1538
      %v1540 = vpop.f32.mrb[0].mxu0
      %v1541 = vpop.f32.mrb[0].mxu0
      %v1542 = vadd.f32 0.0, %v1541
      %v1543 = vpop.f32.mrb[0].mxu0
      %1544 = vmatprep.mubr.bf16.mxu0 0
      %1545 = vmatmul.mubr.bf16.gmra.mrb[0].mxu0 %v1475
      %v1546 = vpop.f32.mrb[0].mxu0
      %v1547 = vadd.f32 0.0, %v1546
      %v1548 = vpop.f32.mrb[0].mxu0
      %v1549 = vpop.f32.mrb[0].mxu0
      %v1550 = vpop.f32.mrb[0].mxu0
      %1551 = vdwg.mxu0
      %v1552 = vadd.f32 %v1437, %v1515
      %v1553 = vadd.f32 %v1438, %v1518
      %v1554 = vadd.f32 %v1439, %v1523
      %v1555 = vadd.f32 %v1440, %v1526
      %v1556 = vadd.f32 %v1441, %v1531
      %v1557 = vadd.f32 %v1442, %v1534
      %v1558 = vadd.f32 %v1443, %v1539
      %v1559 = vadd.f32 %v1444, %v1542
      %v1560 = vadd.f32 %v1445, %v1547
      %v1561 = vpack.c.bf16 %v1553, %v1552
      %v1562 = vpack.c.bf16 %v1555, %v1554
      %v1563 = vpack.c.bf16 %v1557, %v1556
      %v1564 = vpack.c.bf16 %v1559, %v1558
      %v1565 = vpack.c.bf16 %v1560, %v1560
      %v1571 = vunpack.c.l.b16 %v1561
      %v1572 = vunpack.c.h.b16 %v1561
      %v1573 = vunpack.c.l.b16 %v1562
      %v1574 = vunpack.c.h.b16 %v1562
      %v1575 = vunpack.c.l.b16 %v1563
      %v1576 = vunpack.c.h.b16 %v1563
      %v1577 = vunpack.c.l.b16 %v1564
      %v1578 = vunpack.c.h.b16 %v1564
      %v1579 = vunpack.c.l.b16 %v1565
      %v1580 = vpack.c.b16 %v1571, %v1571
      %v1581 = vpack.c.b16 %v1572, %v1572
      %v1582 = vpack.c.b16 %v1573, %v1573
      %v1583 = vpack.c.b16 %v1574, %v1574
      %v1584 = vpack.c.b16 %v1575, %v1575
      %v1585 = vpack.c.b16 %v1576, %v1576
      %v1586 = vpack.c.b16 %v1577, %v1577
      %v1587 = vpack.c.b16 %v1578, %v1578
      %v1588 = vpack.c.b16 %v1579, %v1579
      %vm1598 = vcmask 60416
      %1599 = vst.msk [vmem:[%s218] sm:$0xf] %vm1598, %v1580
      %1600 = vst.msk [vmem:[%s218 + $0x4] sm:$0xf] %vm1598, %v1581
      %1601 = vst.msk [vmem:[%s218 + $0x8] sm:$0xf] %vm1598, %v1582
      %1602 = vst.msk [vmem:[%s218 + $0xc] sm:$0xf] %vm1598, %v1583
      %1603 = vst.msk [vmem:[%s218 + $0x10] sm:$0xf] %vm1598, %v1584
      %1604 = vst.msk [vmem:[%s218 + $0x14] sm:$0xf] %vm1598, %v1585
      %1605 = vst.msk [vmem:[%s218 + $0x18] sm:$0xf] %vm1598, %v1586
      %1606 = vst.msk [vmem:[%s218 + $0x1c] sm:$0xf] %vm1598, %v1587
      %1607 = vst.msk [vmem:[%s218 + $0x20] sm:$0xf] %vm1598, %v1588
      %v1608 = vlaneseq
      %v1609 = vshrl.u32 %v1608, 7
      %v1610 = vadd.s32 %v1609, 8
      %v1611 = vadd.s32 %v1609, 16
      %v1612 = vadd.s32 %v1609, 24
      %v1613 = vadd.s32 %v1609, 32
      %v1614 = vadd.s32 %v1609, 40
      %v1615 = vadd.s32 %v1609, 48
      %v1616 = vadd.s32 %v1609, 56
      %v1617 = vadd.s32 %v1609, 64
      %vm1618 = vcmp.lt.s32.totalorder %v1609, 0
      %v1619 = vsub.s32 0, %v1609
      %v1620 = vsel %vm1618, %v1619, %v1609
      %v1621 = vmul.u32.u64.compose %v1620, 3817748708
      %v1622 = vextract.low.u32 %v1621
      %v1623 = vextract.high.u32 %v1621
      %v1624 = vshrl.u32 %v1623, 3
      %v1625 = vmul.u32 %v1624, 9
      %v1626 = vsub.s32 %v1620, %v1625
      %v1627 = vsub.s32 0, %v1626
      %v1628 = vsel %vm1618, %v1627, %v1626
      %vm1629 = vcmp.lt.s32.totalorder %v1610, 0
      %v1630 = vsub.s32 0, %v1610
      %v1631 = vsel %vm1629, %v1630, %v1610
      %v1632 = vmul.u32.u64.compose %v1631, 3817748708
      %v1633 = vextract.low.u32 %v1632
      %v1634 = vextract.high.u32 %v1632
      %v1635 = vshrl.u32 %v1634, 3
      %v1636 = vmul.u32 %v1635, 9
      %v1637 = vsub.s32 %v1631, %v1636
      %v1638 = vsub.s32 0, %v1637
      %v1639 = vsel %vm1629, %v1638, %v1637
      %vm1640 = vcmp.lt.s32.totalorder %v1611, 0
      %v1641 = vsub.s32 0, %v1611
      %v1642 = vsel %vm1640, %v1641, %v1611
      %v1643 = vmul.u32.u64.compose %v1642, 3817748708
      %v1644 = vextract.low.u32 %v1643
      %v1645 = vextract.high.u32 %v1643
      %v1646 = vshrl.u32 %v1645, 3
      %v1647 = vmul.u32 %v1646, 9
      %v1648 = vsub.s32 %v1642, %v1647
      %v1649 = vsub.s32 0, %v1648
      %v1650 = vsel %vm1640, %v1649, %v1648
      %vm1651 = vcmp.lt.s32.totalorder %v1612, 0
      %v1652 = vsub.s32 0, %v1612
      %v1653 = vsel %vm1651, %v1652, %v1612
      %v1654 = vmul.u32.u64.compose %v1653, 3817748708
      %v1655 = vextract.low.u32 %v1654
      %v1656 = vextract.high.u32 %v1654
      %v1657 = vshrl.u32 %v1656, 3
      %v1658 = vmul.u32 %v1657, 9
      %v1659 = vsub.s32 %v1653, %v1658
      %v1660 = vsub.s32 0, %v1659
      %v1661 = vsel %vm1651, %v1660, %v1659
      %vm1662 = vcmp.lt.s32.totalorder %v1613, 0
      %v1663 = vsub.s32 0, %v1613
      %v1664 = vsel %vm1662, %v1663, %v1613
      %v1665 = vmul.u32.u64.compose %v1664, 3817748708
      %v1666 = vextract.low.u32 %v1665
      %v1667 = vextract.high.u32 %v1665
      %v1668 = vshrl.u32 %v1667, 3
      %v1669 = vmul.u32 %v1668, 9
      %v1670 = vsub.s32 %v1664, %v1669
      %v1671 = vsub.s32 0, %v1670
      %v1672 = vsel %vm1662, %v1671, %v1670
      %vm1673 = vcmp.lt.s32.totalorder %v1614, 0
      %v1674 = vsub.s32 0, %v1614
      %v1675 = vsel %vm1673, %v1674, %v1614
      %v1676 = vmul.u32.u64.compose %v1675, 3817748708
      %v1677 = vextract.low.u32 %v1676
      %v1678 = vextract.high.u32 %v1676
      %v1679 = vshrl.u32 %v1678, 3
      %v1680 = vmul.u32 %v1679, 9
      %v1681 = vsub.s32 %v1675, %v1680
      %v1682 = vsub.s32 0, %v1681
      %v1683 = vsel %vm1673, %v1682, %v1681
      %vm1684 = vcmp.lt.s32.totalorder %v1615, 0
      %v1685 = vsub.s32 0, %v1615
      %v1686 = vsel %vm1684, %v1685, %v1615
      %v1687 = vmul.u32.u64.compose %v1686, 3817748708
      %v1688 = vextract.low.u32 %v1687
      %v1689 = vextract.high.u32 %v1687
      %v1690 = vshrl.u32 %v1689, 3
      %v1691 = vmul.u32 %v1690, 9
      %v1692 = vsub.s32 %v1686, %v1691
      %v1693 = vsub.s32 0, %v1692
      %v1694 = vsel %vm1684, %v1693, %v1692
      %vm1695 = vcmp.lt.s32.totalorder %v1616, 0
      %v1696 = vsub.s32 0, %v1616
      %v1697 = vsel %vm1695, %v1696, %v1616
      %v1698 = vmul.u32.u64.compose %v1697, 3817748708
      %v1699 = vextract.low.u32 %v1698
      %v1700 = vextract.high.u32 %v1698
      %v1701 = vshrl.u32 %v1700, 3
      %v1702 = vmul.u32 %v1701, 9
      %v1703 = vsub.s32 %v1697, %v1702
      %v1704 = vsub.s32 0, %v1703
      %v1705 = vsel %vm1695, %v1704, %v1703
      %vm1706 = vcmp.lt.s32.totalorder %v1617, 0
      %v1707 = vsub.s32 0, %v1617
      %v1708 = vsel %vm1706, %v1707, %v1617
      %v1709 = vmul.u32.u64.compose %v1708, 3817748708
      %v1710 = vextract.low.u32 %v1709
      %v1711 = vextract.high.u32 %v1709
      %v1712 = vshrl.u32 %v1711, 3
      %v1713 = vmul.u32 %v1712, 9
      %v1714 = vsub.s32 %v1708, %v1713
      %v1715 = vsub.s32 0, %v1714
      %v1716 = vsel %vm1706, %v1715, %v1714
      %vm1717 = vcmp.ne.s32.totalorder %v1628, 0
      %vm1718 = vcmp.ne.s32.totalorder %v1639, 0
      %vm1719 = vcmp.ne.s32.totalorder %v1650, 0
      %vm1720 = vcmp.ne.s32.totalorder %v1661, 0
      %vm1721 = vcmp.ne.s32.totalorder %v1672, 0
      %vm1722 = vcmp.ne.s32.totalorder %v1683, 0
      %vm1723 = vcmp.ne.s32.totalorder %v1694, 0
      %vm1724 = vcmp.ne.s32.totalorder %v1705, 0
      %vm1725 = vcmp.ne.s32.totalorder %v1716, 0
      %vm1726 = vcmp.lt.s32.totalorder %v1628, 0
      %vm1727 = vcmp.lt.s32.totalorder %v1639, 0
      %vm1728 = vcmp.lt.s32.totalorder %v1650, 0
      %vm1729 = vcmp.lt.s32.totalorder %v1661, 0
      %vm1730 = vcmp.lt.s32.totalorder %v1672, 0
      %vm1731 = vcmp.lt.s32.totalorder %v1683, 0
      %vm1732 = vcmp.lt.s32.totalorder %v1694, 0
      %vm1733 = vcmp.lt.s32.totalorder %v1705, 0
      %vm1734 = vcmp.lt.s32.totalorder %v1716, 0
      %vm1735 = vmand %vm1726, %vm1717
      %vm1736 = vmand %vm1727, %vm1718
      %vm1737 = vmand %vm1728, %vm1719
      %vm1738 = vmand %vm1729, %vm1720
      %vm1739 = vmand %vm1730, %vm1721
      %vm1740 = vmand %vm1731, %vm1722
      %vm1741 = vmand %vm1732, %vm1723
      %vm1742 = vmand %vm1733, %vm1724
      %vm1743 = vmand %vm1734, %vm1725
      %v1744 = vadd.s32 %v1628, 9
      %v1745 = vadd.s32 %v1639, 9
      %v1746 = vadd.s32 %v1650, 9
      %v1747 = vadd.s32 %v1661, 9
      %v1748 = vadd.s32 %v1672, 9
      %v1749 = vadd.s32 %v1683, 9
      %v1750 = vadd.s32 %v1694, 9
      %v1751 = vadd.s32 %v1705, 9
      %v1752 = vadd.s32 %v1716, 9
      %v1753 = vsel %vm1735, %v1744, %v1628
      %v1754 = vsel %vm1736, %v1745, %v1639
      %v1755 = vsel %vm1737, %v1746, %v1650
      %v1756 = vsel %vm1738, %v1747, %v1661
      %v1757 = vsel %vm1739, %v1748, %v1672
      %v1758 = vsel %vm1740, %v1749, %v1683
      %v1759 = vsel %vm1741, %v1750, %v1694
      %v1760 = vsel %vm1742, %v1751, %v1705
      %v1761 = vsel %vm1743, %v1752, %v1716
      %vm1762 = vcmp.lt.s32.totalorder %v1753, 8
      %vm1763 = vcmp.lt.s32.totalorder %v1754, 8
      %vm1764 = vcmp.lt.s32.totalorder %v1755, 8
      %vm1765 = vcmp.lt.s32.totalorder %v1756, 8
      %vm1766 = vcmp.lt.s32.totalorder %v1757, 8
      %vm1767 = vcmp.lt.s32.totalorder %v1758, 8
      %vm1768 = vcmp.lt.s32.totalorder %v1759, 8
      %vm1769 = vcmp.lt.s32.totalorder %v1760, 8
      %vm1770 = vcmp.lt.s32.totalorder %v1761, 8
      %v1771 = vsel %vm1762, 1, 0
      %v1772 = vsel %vm1763, 1, 0
      %v1773 = vsel %vm1764, 1, 0
      %v1774 = vsel %vm1765, 1, 0
      %v1775 = vsel %vm1766, 1, 0
      %v1776 = vsel %vm1767, 1, 0
      %v1777 = vsel %vm1768, 1, 0
      %v1778 = vsel %vm1769, 1, 0
      %v1779 = vsel %vm1770, 1, 0
      %vm1780 = vcmp.eq.s32.totalorder %v1771, 1
      %vm1781 = vcmp.eq.s32.totalorder %v1772, 1
      %vm1782 = vcmp.eq.s32.totalorder %v1773, 1
      %vm1783 = vcmp.eq.s32.totalorder %v1774, 1
      %vm1784 = vcmp.eq.s32.totalorder %v1775, 1
      %vm1785 = vcmp.eq.s32.totalorder %v1776, 1
      %vm1786 = vcmp.eq.s32.totalorder %v1777, 1
      %vm1787 = vcmp.eq.s32.totalorder %v1778, 1
      %vm1788 = vcmp.eq.s32.totalorder %v1779, 1
      %v1789 = vsel %vm1780, %v1552, 0.0
      %v1790 = vsel %vm1781, %v1553, 0.0
      %v1791 = vsel %vm1782, %v1554, 0.0
      %v1792 = vsel %vm1783, %v1555, 0.0
      %v1793 = vsel %vm1784, %v1556, 0.0
      %v1794 = vsel %vm1785, %v1557, 0.0
      %v1795 = vsel %vm1786, %v1558, 0.0
      %v1796 = vsel %vm1787, %v1559, 0.0
      %v1797 = vsel %vm1788, %v1560, 0.0
      %vm1798 = vcmask 64512
      %v1799 = vsel %vm1798, %v1789, 0.0
      %v1800 = vsel %vm1798, %v1790, 0.0
      %v1801 = vadd.f32 %v1799, %v1800
      %v1802 = vsel %vm1798, %v1791, 0.0
      %v1803 = vadd.f32 %v1801, %v1802
      %v1804 = vsel %vm1798, %v1792, 0.0
      %v1805 = vadd.f32 %v1803, %v1804
      %v1806 = vsel %vm1798, %v1793, 0.0
      %v1807 = vadd.f32 %v1805, %v1806
      %v1808 = vsel %vm1798, %v1794, 0.0
      %v1809 = vadd.f32 %v1807, %v1808
      %v1810 = vsel %vm1798, %v1795, 0.0
      %v1811 = vadd.f32 %v1809, %v1810
      %v1812 = vsel %vm1798, %v1796, 0.0
      %v1813 = vadd.f32 %v1811, %v1812
      %v1814 = vsel %vm1798, %v1797, 0.0
      %v1815 = vadd.f32 %v1813, %v1814
      %v1816 = vrot.slane %v1815, 4
      %v1817 = vadd.f32 %v1815, %v1816
      %v1818 = vrot.slane %v1817, 2
      %v1819 = vadd.f32 %v1817, %v1818
      %v1820 = vrot.slane %v1819, 1
      %v1821 = vadd.f32 %v1819, %v1820
      %vm1822 = vcmask 57344
      %1823 = vst.msk [vmem:[%s225] sm:$0x1] %vm1822, %v1821
      %v1824 = vmul.f32 %v1789, %v1789
      %v1825 = vmul.f32 %v1790, %v1790
      %v1826 = vmul.f32 %v1791, %v1791
      %v1827 = vmul.f32 %v1792, %v1792
      %v1828 = vmul.f32 %v1793, %v1793
      %v1829 = vmul.f32 %v1794, %v1794
      %v1830 = vmul.f32 %v1795, %v1795
      %v1831 = vmul.f32 %v1796, %v1796
      %v1832 = vmul.f32 %v1797, %v1797
      %v1833 = vsel %vm1798, %v1824, 0.0
      %v1834 = vsel %vm1798, %v1825, 0.0
      %v1835 = vadd.f32 %v1833, %v1834
      %v1836 = vsel %vm1798, %v1826, 0.0
      %v1837 = vadd.f32 %v1835, %v1836
      %v1838 = vsel %vm1798, %v1827, 0.0
      %v1839 = vadd.f32 %v1837, %v1838
      %v1840 = vsel %vm1798, %v1828, 0.0
      %v1841 = vadd.f32 %v1839, %v1840
      %v1842 = vsel %vm1798, %v1829, 0.0
      %v1843 = vadd.f32 %v1841, %v1842
      %v1844 = vsel %vm1798, %v1830, 0.0
      %v1845 = vadd.f32 %v1843, %v1844
      %v1846 = vsel %vm1798, %v1831, 0.0
      %v1847 = vadd.f32 %v1845, %v1846
      %v1848 = vsel %vm1798, %v1832, 0.0
      %v1849 = vadd.f32 %v1847, %v1848
      %v1850 = vrot.slane %v1849, 4
      %v1851 = vadd.f32 %v1849, %v1850
      %v1852 = vrot.slane %v1851, 2
      %v1853 = vadd.f32 %v1851, %v1852
      %v1854 = vrot.slane %v1853, 1
      %v1855 = vadd.f32 %v1853, %v1854
      %1856 = vst.msk [vmem:[%s225 + $0x1] sm:$0x1] %vm1822, %v1855
      %p1857 = scmp.lt.s32.totalorder %s19, 1
      %s1858 = scalar_select %p1857, %s19, 1
      %p1859 = scmp.lt.s32.totalorder %s20, 0
      %s1860 = scalar_select %p1859, %s20, 0
      %s1861 = smul.addr %s1860, 9
      %s1862 = smul.addr %s1858, 9
      %s1863 = sadd.s32 %s1861, %s1862
      %s1864 = smul.addr %s1863, 4
      %s1865 = scalar_lea.vmem %s2, %s1864
      %p1866 = scmp.lt.s32.totalorder %s19, 1
      %s1867 = scalar_select %p1866, %s19, 1
      %p1868 = scmp.lt.s32.totalorder %s20, 0
      %s1869 = scalar_select %p1868, %s20, 0
      %s1870 = sadd.s32 %s1869, %s1867
      %s1871 = smul.addr %s1870, 2
      %s1872 = scalar_lea.vmem %s3, %s1871
      // Predicated region
      $region29: #{convolutional_block.2} parent=27 // pred_check
        %p1873 = pneg %p96
      $region30: #{convolutional_block.2} parent=27 // pred_check_branch
        %1875 = sbr.rel (%p1873) target = $region32
      $region31: #{convolutional_block.2} parent=27 // pred_region
        _
      $region32: #{convolutional_block.2} parent=27 // pred_fallthru
        _
      // Predicated region
      $region33: #{convolutional_block.2} parent=27 // pred_check
        %p1876 = pneg %p124
      $region34: #{convolutional_block.2} parent=27 // pred_check_branch
        %1878 = sbr.rel (%p1876) target = $region36
      $region35: #{convolutional_block.2} parent=27 // pred_region
        _
      $region36: #{convolutional_block.2} parent=27 // pred_fallthru
        _
    $region28: #{convolutional_block.2} parent=5 // pred_fallthru
      _
    %p1879 = scmp.le.s32.totalorder 2, %s10
    // Predicated region
    $region37: #{convolutional_block.2} parent=5 // pred_check
      %p1880 = pneg %p1879
    $region38: #{convolutional_block.2} parent=5 // pred_check_branch
      %1882 = sbr.rel (%p1880) target = $region40
    $region39: #{convolutional_block.2} parent=5 // pred_region
      %s1883 = ssub.s32 %s10, 2
      // Predicated region
      $region41: #{convolutional_block.2} parent=39 // pred_check
        %p1884 = pneg %p102
      $region42: #{convolutional_block.2} parent=39 // pred_check_branch
        %1886 = sbr.rel (%p1884) target = $region44
      $region43: #{convolutional_block.2} parent=39 // pred_region
        %p1887 = scmp.lt.s32.totalorder %s21, 1
        %s1888 = scalar_select %p1887, %s21, 1
        %p1889 = scmp.lt.s32.totalorder %s22, 0
        %s1890 = scalar_select %p1889, %s22, 0
        %s1891 = smul.addr %s1890, 9
        %s1892 = smul.addr %s1888, 9
        %s1893 = sadd.s32 %s1891, %s1892
        %s1894 = smul.addr %s1893, 4
        %s1895 = scalar_lea.vmem %s2, %s1894
      $region44: #{convolutional_block.2} parent=39 // pred_fallthru
        _
      // Predicated region
      $region45: #{convolutional_block.2} parent=39 // pred_check
        %p1896 = pneg %p130
      $region46: #{convolutional_block.2} parent=39 // pred_check_branch
        %1898 = sbr.rel (%p1896) target = $region48
      $region47: #{convolutional_block.2} parent=39 // pred_region
        %p1899 = scmp.lt.s32.totalorder %s21, 1
        %s1900 = scalar_select %p1899, %s21, 1
        %p1901 = scmp.lt.s32.totalorder %s22, 0
        %s1902 = scalar_select %p1901, %s22, 0
        %s1903 = sadd.s32 %s1902, %s1900
        %s1904 = smul.addr %s1903, 2
        %s1905 = scalar_lea.vmem %s3, %s1904
      $region48: #{convolutional_block.2} parent=39 // pred_fallthru
        _
    $region40: #{convolutional_block.2} parent=5 // pred_fallthru
      _
  $region6: #{convolutional_block.2} parent=0 // loop_footer
    %s14 = sadd.s32 1, %s10
  $region7: #{convolutional_block.2} parent=0 // loop_footer_branch
    %9 = sbr.rel target = $region3
  $region8: #{convolutional_block.2} parent=0 // loop_exit
    _

</llo_original>
